<compile_context>
chip_gen: v7x
topology: tpu7x:2x2x1
jax: 0.10.0
libtpu: 0.0.40
codegen_flags: <defaults>
</compile_context>

<pallas_src>
import jax
import jax.numpy as jnp
from jax.experimental import pallas as pl
from jax.experimental.pallas import tpu as pltpu


def _round_up(x, m):
    return ((x + m - 1) // m) * m


# ---------------------------------------------------------------------------
# Fused kernel: folded first layer (one-hot + raw x) + rest of the MLP
# ---------------------------------------------------------------------------
def _make_tabular_kernel(table_sizes, has_num, n_rest):
    """Kernel refs: [cat_ids], [x], [w_cat], [w_x], b1, (w, b)*n_rest, out."""
    n_tables = len(table_sizes)
    n_cat_total = sum(table_sizes)

    def kernel(*refs):
        pos = 0
        cat_ref = x_ref = wcat_ref = wx_ref = None
        if n_tables:
            cat_ref = refs[pos]; pos += 1
        if has_num:
            x_ref = refs[pos]; pos += 1
        if n_tables:
            wcat_ref = refs[pos]; pos += 1
        if has_num:
            wx_ref = refs[pos]; pos += 1
        b1_ref = refs[pos]; pos += 1
        wb_refs = refs[pos:pos + 2 * n_rest]; pos += 2 * n_rest
        o_ref = refs[pos]

        # ---- folded first layer: emb lookup + numeric concat + Linear ----
        acc = None
        if n_tables:
            cat = cat_ref[...]                                     # (TB, n_tables) i32
            tb = cat.shape[0]
            iota = jax.lax.broadcasted_iota(jnp.int32, (tb, n_cat_total), 1)
            hit = None
            off = 0
            for t, n_t in enumerate(table_sizes):
                # clamp out-of-range ids (nn.Embedding would raise)
                idx = jnp.clip(cat[:, t:t + 1], 0, n_t - 1) + off  # (TB, 1)
                m = iota == idx
                hit = m if hit is None else (hit | m)
                off += n_t
            onehot = hit.astype(jnp.bfloat16)                      # (TB, n_cat_total)
            acc = jnp.dot(onehot, wcat_ref[...],
                          preferred_element_type=jnp.float32)
        if has_num:
            part = jnp.dot(x_ref[...].astype(jnp.bfloat16), wx_ref[...],
                           preferred_element_type=jnp.float32)
            acc = part if acc is None else acc + part
        h = jnp.maximum(acc + b1_ref[...], 0.0)                    # first_layer ReLU

        # ---- remaining Linear [+ReLU] layers; bf16 operands, f32 accum ----
        for li in range(n_rest):
            w = wb_refs[2 * li][...]                               # (in, out) bf16
            b = wb_refs[2 * li + 1][...]                           # (1, out)  f32
            h = jnp.dot(h.astype(jnp.bfloat16), w,
                        preferred_element_type=jnp.float32) + b
            if li < n_rest - 1:
                h = jnp.maximum(h, 0.0)                            # no ReLU on output layer
        o_ref[...] = h.astype(o_ref.dtype)                         # narrow (TB, out) store

    return kernel


# ---------------------------------------------------------------------------
# TabularNet wrapper
# ---------------------------------------------------------------------------
class TabularNetPallas:
    def __init__(self, in_features, out_features=2, categorical_features=(),
                 emb_dims=(), hidden_dims=(64, 32, 32, 16), key=None):
        assert len(categorical_features) == len(emb_dims)
        self.in_features = in_features
        self.out_features = out_features
        self.cat_idx = list(categorical_features)
        self.lin_idx = [i for i in range(in_features) if i not in self.cat_idx]
        self.emb_dims = list(emb_dims)
        self.emb_len = sum(d for _, d in self.emb_dims)
        self.lin_len = len(self.lin_idx)
        self.d_feat = self.emb_len + self.lin_len
        self.table_sizes = tuple(n for n, _ in self.emb_dims)
        assert self.d_feat > 0

        key = jax.random.PRNGKey(42) if key is None else key
        keys = iter(jax.random.split(key, 64))

        # Embedding tables ~ N(0, 1) (PyTorch nn.Embedding default).
        self.emb_tables = [
            jax.random.normal(next(keys), (n, d), dtype=jnp.float32)
            for n, d in self.emb_dims
        ]

        def linear_init(fan_in, fan_out, kaiming=False):
            kw, kb = next(keys), next(keys)
            if kaiming:   # nn.init.kaiming_normal_ on the output layer weight
                w = jax.random.normal(kw, (fan_in, fan_out), jnp.float32) * jnp.sqrt(2.0 / fan_in)
            else:         # nn.Linear default: U(-1/sqrt(fan_in), 1/sqrt(fan_in))
                bound = 1.0 / jnp.sqrt(fan_in)
                w = jax.random.uniform(kw, (fan_in, fan_out), jnp.float32, -bound, bound)
            bound = 1.0 / jnp.sqrt(fan_in)
            b = jax.random.uniform(kb, (1, fan_out), jnp.float32, -bound, bound)
            return w, b

        dims = [self.d_feat] + list(hidden_dims)
        self.params_f32 = []
        for i in range(len(dims) - 1):                     # first_layer + lin_layers
            self.params_f32.append(linear_init(dims[i], dims[i + 1]))
        self.params_f32.append(linear_init(dims[-1], out_features, kaiming=True))

        # ---- constant-fold feature assembly into the first layer ------------
        w1, b1 = self.params_f32[0]                        # (d_feat, H1), (1, H1)
        h1 = w1.shape[1]
        cat_blocks = []
        emb_off = 0
        for table in self.emb_tables:
            n_t, d_t = table.shape
            cat_blocks.append(table @ w1[emb_off:emb_off + d_t, :])   # (n_t, H1)
            emb_off += d_t
        self.k_w_cat = (jnp.concatenate(cat_blocks, axis=0).astype(jnp.bfloat16)
                        if cat_blocks else None)                      # (sum n_t, H1)
        if self.lin_len > 0:
            # Raw-x weight: numeric rows get their W1 rows, categorical rows stay 0,
            # so the kernel can matmul the untouched x tile directly.
            xw = jnp.zeros((in_features, h1), jnp.float32)
            xw = xw.at[jnp.array(self.lin_idx), :].set(
                w1[self.emb_len:self.emb_len + self.lin_len, :])
            self.k_w_x = xw.astype(jnp.bfloat16)                      # (F, H1)
        else:
            self.k_w_x = None
        self.k_b1 = b1.astype(jnp.float32)
        self.k_rest_w = [w.astype(jnp.bfloat16) for w, _ in self.params_f32[1:]]
        self.k_rest_b = [b.astype(jnp.float32) for _, b in self.params_f32[1:]]

        self._kernel = _make_tabular_kernel(self.table_sizes, self.lin_len > 0,
                                            len(self.k_rest_w))

    # ----------------------------------------------------------------------
    def __call__(self, X, block_rows=1024):
        """X: (B, in_features) float (categorical columns hold integer values)."""
        B, F = X.shape
        assert F == self.in_features

        # Batch tile: as big as block_rows allows (amortize ~0.35us/step), but
        # split into >=2 blocks whenever the batch allows so v7x's two
        # TensorCores both get work on the "parallel" axis.
        TB = max(8, _round_up(min(int(block_rows), B), 8))
        if pl.cdiv(B, TB) < 2 and B >= 16:
            TB = _round_up(pl.cdiv(B, 2), 8)
        n_blocks = pl.cdiv(B, TB)      # no batch padding: Pallas clamps the edge block

        Xf = X.astype(jnp.float32)
        inputs, in_specs = [], []
        if self.table_sizes:           # int32 side channel with the categorical ids
            cat_ids = Xf[:, jnp.array(self.cat_idx)].astype(jnp.int32)   # (B, n_tables)
            inputs.append(cat_ids)
            in_specs.append(pl.BlockSpec((TB, len(self.cat_idx)), lambda i: (i, 0)))
        if self.lin_len > 0:
            inputs.append(Xf)
            in_specs.append(pl.BlockSpec((TB, F), lambda i: (i, 0)))
        if self.table_sizes:           # resident folded weights
            inputs.append(self.k_w_cat)
            in_specs.append(pl.BlockSpec(self.k_w_cat.shape, lambda i: (0, 0)))
        if self.lin_len > 0:
            inputs.append(self.k_w_x)
            in_specs.append(pl.BlockSpec(self.k_w_x.shape, lambda i: (0, 0)))
        inputs.append(self.k_b1)
        in_specs.append(pl.BlockSpec(self.k_b1.shape, lambda i: (0, 0)))
        for w, b in zip(self.k_rest_w, self.k_rest_b):
            inputs += [w, b]
            in_specs += [pl.BlockSpec(w.shape, lambda i: (0, 0)),
                         pl.BlockSpec(b.shape, lambda i: (0, 0))]

        # VMEM footprint even at TB=2048 is < 1 MiB (x + cat + out double-buffered
        # plus resident weights), well under the 32 MiB default scoped limit on
        # v5e/v6e/v7x, so no vmem_limit_bytes override is needed.
        out = pl.pallas_call(
            self._kernel,
            out_shape=jax.ShapeDtypeStruct((B, self.out_features), jnp.float32),
            grid=(n_blocks,),
            in_specs=in_specs,
            out_specs=pl.BlockSpec((TB, self.out_features), lambda i: (i, 0)),
            compiler_params=pltpu.CompilerParams(
                dimension_semantics=("parallel",)),
        )(*inputs)
        return out

    # ----------------------------------------------------------------------
    def reference(self, X):
        """Pure-JAX reference replicating the kernel's folded bf16 scheme exactly."""
        Xf = X.astype(jnp.float32)
        acc = None
        if self.table_sizes:
            ohs = []
            for t, n_t in enumerate(self.table_sizes):
                idx = jnp.clip(Xf[:, self.cat_idx[t]].astype(jnp.int32), 0, n_t - 1)
                ohs.append(jax.nn.one_hot(idx, n_t, dtype=jnp.float32))
            onehot = jnp.concatenate(ohs, axis=1).astype(jnp.bfloat16)
            acc = jnp.dot(onehot, self.k_w_cat, preferred_element_type=jnp.float32)
        if self.lin_len > 0:
            part = jnp.dot(Xf.astype(jnp.bfloat16), self.k_w_x,
                           preferred_element_type=jnp.float32)
            acc = part if acc is None else acc + part
        h = jnp.maximum(acc + self.k_b1, 0.0)
        for i, (w, b) in enumerate(zip(self.k_rest_w, self.k_rest_b)):
            h = jnp.dot(h.astype(jnp.bfloat16), w, preferred_element_type=jnp.float32) + b
            if i < len(self.k_rest_w) - 1:
                h = jnp.maximum(h, 0.0)
        return h

    def reference_f32(self, X):
        """f32 forward of the original (unfolded) module semantics, eval mode."""
        Xf = X.astype(jnp.float32)
        parts = [jnp.take(tab, Xf[:, self.cat_idx[t]].astype(jnp.int32), axis=0)
                 for t, tab in enumerate(self.emb_tables)]
        if self.lin_len > 0:
            parts.append(Xf[:, jnp.array(self.lin_idx)])
        h = jnp.concatenate(parts, axis=1) if len(parts) > 1 else parts[0]
        n = len(self.params_f32)
        for i, (w, b) in enumerate(self.params_f32):
            h = h @ w + b
            if i < n - 1:
                h = jnp.maximum(h, 0.0)
        return h


# ---------------------------------------------------------------------------
if __name__ == "__main__":
    key = jax.random.PRNGKey(0)
    B, in_features = 300, 8                 # default TB -> 2 blocks of 152 rows
    cat_features = [0, 3]
    emb_dims = [(5, 3), (7, 4)]             # emb_len = 7, lin_len = 6 -> 13 input feats
    hidden_dims = [64, 32, 32, 16]
    out_features = 2

    k_num, k_cat0, k_cat1 = jax.random.split(key, 3)
    X = jax.random.normal(k_num, (B, in_features), dtype=jnp.float32)
    # categorical columns hold valid integer indices stored as float (like .long())
    X = X.at[:, 0].set(jax.random.randint(k_cat0, (B,), 0, 5).astype(jnp.float32))
    X = X.at[:, 3].set(jax.random.randint(k_cat1, (B,), 0, 7).astype(jnp.float32))

    model = TabularNetPallas(in_features, out_features, cat_features, emb_dims, hidden_dims)

    out = jax.block_until_ready(model(X))   # default block_rows=1024
    assert out.shape == (B, out_features)

    # Exact-scheme reference (same bf16 MXU-operand numerics as the kernel).
    ref = model.reference(X)
    max_err = float(jnp.max(jnp.abs(out - ref)))
    assert jnp.allclose(out, ref, atol=2e-3, rtol=2e-3), \
        f"mismatch vs folded reference, max err {max_err}"

    # Loose sanity check vs the original f32 module semantics (bf16 contract).
    ref32 = model.reference_f32(X)
    f32_err = float(jnp.max(jnp.abs(out - ref32)))
    assert f32_err < 0.25, f"fold broke module semantics, max err vs f32 {f32_err}"

    print("KERNEL_OK")
</pallas_src>

<mosaic_0001>
module attributes {stable_mosaic.version = 11 : i64} {
  func.func @kernel(%arg0: i32, %arg1: memref<152x2xi32, #tpu.memory_space<vmem>>, %arg2: memref<152x8xf32, #tpu.memory_space<vmem>>, %arg3: memref<12x64xbf16, #tpu.memory_space<vmem>>, %arg4: memref<8x64xbf16, #tpu.memory_space<vmem>>, %arg5: memref<1x64xf32, #tpu.memory_space<vmem>>, %arg6: memref<64x32xbf16, #tpu.memory_space<vmem>>, %arg7: memref<1x32xf32, #tpu.memory_space<vmem>>, %arg8: memref<32x32xbf16, #tpu.memory_space<vmem>>, %arg9: memref<1x32xf32, #tpu.memory_space<vmem>>, %arg10: memref<32x16xbf16, #tpu.memory_space<vmem>>, %arg11: memref<1x16xf32, #tpu.memory_space<vmem>>, %arg12: memref<16x2xbf16, #tpu.memory_space<vmem>>, %arg13: memref<1x2xf32, #tpu.memory_space<vmem>>, %arg14: memref<152x2xf32, #tpu.memory_space<vmem>>) attributes {dimension_semantics = [#tpu.dimension_semantics<parallel>], iteration_bounds = array<i64: 2>, scalar_prefetch = 0 : i64, scratch_operands = 0 : i64, tpu.core_type = #tpu.core_type<tc>, window_params = [{transform_indices = @transform_0, window_bounds = array<i64: 152, 2>}, {transform_indices = @transform_1, window_bounds = array<i64: 152, 8>}, {pipeline_mode = #tpu.pipeline_mode<synchronous>, transform_indices = @transform_2, window_bounds = array<i64: 12, 64>}, {pipeline_mode = #tpu.pipeline_mode<synchronous>, transform_indices = @transform_3, window_bounds = array<i64: 8, 64>}, {pipeline_mode = #tpu.pipeline_mode<synchronous>, transform_indices = @transform_4, window_bounds = array<i64: 1, 64>}, {pipeline_mode = #tpu.pipeline_mode<synchronous>, transform_indices = @transform_5, window_bounds = array<i64: 64, 32>}, {pipeline_mode = #tpu.pipeline_mode<synchronous>, transform_indices = @transform_6, window_bounds = array<i64: 1, 32>}, {pipeline_mode = #tpu.pipeline_mode<synchronous>, transform_indices = @transform_7, window_bounds = array<i64: 32, 32>}, {pipeline_mode = #tpu.pipeline_mode<synchronous>, transform_indices = @transform_8, window_bounds = array<i64: 1, 32>}, {pipeline_mode = #tpu.pipeline_mode<synchronous>, transform_indices = @transform_9, window_bounds = array<i64: 32, 16>}, {pipeline_mode = #tpu.pipeline_mode<synchronous>, transform_indices = @transform_10, window_bounds = array<i64: 1, 16>}, {pipeline_mode = #tpu.pipeline_mode<synchronous>, transform_indices = @transform_11, window_bounds = array<i64: 16, 2>}, {pipeline_mode = #tpu.pipeline_mode<synchronous>, transform_indices = @transform_12, window_bounds = array<i64: 1, 2>}, {transform_indices = @transform_13, window_bounds = array<i64: 152, 2>}]} {
    %c0 = arith.constant 0 : index
    %c0_0 = arith.constant 0 : index
    %0 = vector.load %arg1[%c0, %c0_0] : memref<152x2xi32, #tpu.memory_space<vmem>>, vector<152x2xi32>
    %1 = tpu.iota {dimensions = array<i32: 1>} : vector<152x12xi32>
    %2 = vector.extract_strided_slice %0 {offsets = [0, 0], sizes = [152, 1], strides = [1, 1]} : vector<152x2xi32> to vector<152x1xi32>
    %c0_i32 = arith.constant 0 : i32
    %c4_i32 = arith.constant 4 : i32
    %3 = vector.broadcast %c0_i32 : i32 to vector<152x1xi32>
    %4 = arith.maxsi %3, %2 : vector<152x1xi32>
    %5 = vector.broadcast %c4_i32 : i32 to vector<152x1xi32>
    %6 = arith.minsi %5, %4 : vector<152x1xi32>
    %c0_i32_1 = arith.constant 0 : i32
    %7 = vector.broadcast %c0_i32_1 : i32 to vector<152x1xi32>
    %8 = arith.addi %6, %7 : vector<152x1xi32>
    %9 = vector.broadcast %8 : vector<152x1xi32> to vector<152x12xi32>
    %10 = arith.cmpi eq, %1, %9 : vector<152x12xi32>
    %11 = vector.extract_strided_slice %0 {offsets = [0, 1], sizes = [152, 1], strides = [1, 1]} : vector<152x2xi32> to vector<152x1xi32>
    %c0_i32_2 = arith.constant 0 : i32
    %c6_i32 = arith.constant 6 : i32
    %12 = vector.broadcast %c0_i32_2 : i32 to vector<152x1xi32>
    %13 = arith.maxsi %12, %11 : vector<152x1xi32>
    %14 = vector.broadcast %c6_i32 : i32 to vector<152x1xi32>
    %15 = arith.minsi %14, %13 : vector<152x1xi32>
    %c5_i32 = arith.constant 5 : i32
    %16 = vector.broadcast %c5_i32 : i32 to vector<152x1xi32>
    %17 = arith.addi %15, %16 : vector<152x1xi32>
    %18 = vector.broadcast %17 : vector<152x1xi32> to vector<152x12xi32>
    %19 = arith.cmpi eq, %1, %18 : vector<152x12xi32>
    %20 = arith.ori %10, %19 : vector<152x12xi1>
    %21 = arith.extui %20 : vector<152x12xi1> to vector<152x12xi32>
    %22 = arith.sitofp %21 : vector<152x12xi32> to vector<152x12xf32>
    %23 = arith.truncf %22 : vector<152x12xf32> to vector<152x12xbf16>
    %c0_3 = arith.constant 0 : index
    %c0_4 = arith.constant 0 : index
    %24 = vector.load %arg3[%c0_3, %c0_4] : memref<12x64xbf16, #tpu.memory_space<vmem>>, vector<12x64xbf16>
    %cst = arith.constant dense<0.000000e+00> : vector<152x64xf32>
    %25 = tpu.matmul %23, %24, %cst {dimension_numbers = #tpu.dot_dimension_numbers<[1], [0], [0], [1], [0, 0, 1, 1], [], []>} : vector<152x12xbf16>, vector<12x64xbf16>, vector<152x64xf32> -> vector<152x64xf32>
    %c0_5 = arith.constant 0 : index
    %c0_6 = arith.constant 0 : index
    %26 = vector.load %arg2[%c0_5, %c0_6] : memref<152x8xf32, #tpu.memory_space<vmem>>, vector<152x8xf32>
    %27 = arith.truncf %26 : vector<152x8xf32> to vector<152x8xbf16>
    %c0_7 = arith.constant 0 : index
    %c0_8 = arith.constant 0 : index
    %28 = vector.load %arg4[%c0_7, %c0_8] : memref<8x64xbf16, #tpu.memory_space<vmem>>, vector<8x64xbf16>
    %cst_9 = arith.constant dense<0.000000e+00> : vector<152x64xf32>
    %29 = tpu.matmul %27, %28, %cst_9 {dimension_numbers = #tpu.dot_dimension_numbers<[1], [0], [0], [1], [0, 0, 1, 1], [], []>} : vector<152x8xbf16>, vector<8x64xbf16>, vector<152x64xf32> -> vector<152x64xf32>
    %30 = arith.addf %25, %29 : vector<152x64xf32>
    %c0_10 = arith.constant 0 : index
    %c0_11 = arith.constant 0 : index
    %31 = vector.load %arg5[%c0_10, %c0_11] : memref<1x64xf32, #tpu.memory_space<vmem>>, vector<1x64xf32>
    %32 = vector.broadcast %31 : vector<1x64xf32> to vector<152x64xf32>
    %33 = arith.addf %30, %32 : vector<152x64xf32>
    %cst_12 = arith.constant 0.000000e+00 : f32
    %34 = vector.broadcast %cst_12 : f32 to vector<152x64xf32>
    %35 = arith.maximumf %33, %34 : vector<152x64xf32>
    %c0_13 = arith.constant 0 : index
    %c0_14 = arith.constant 0 : index
    %36 = vector.load %arg6[%c0_13, %c0_14] : memref<64x32xbf16, #tpu.memory_space<vmem>>, vector<64x32xbf16>
    %c0_15 = arith.constant 0 : index
    %c0_16 = arith.constant 0 : index
    %37 = vector.load %arg7[%c0_15, %c0_16] : memref<1x32xf32, #tpu.memory_space<vmem>>, vector<1x32xf32>
    %38 = arith.truncf %35 : vector<152x64xf32> to vector<152x64xbf16>
    %cst_17 = arith.constant dense<0.000000e+00> : vector<152x32xf32>
    %39 = tpu.matmul %38, %36, %cst_17 {dimension_numbers = #tpu.dot_dimension_numbers<[1], [0], [0], [1], [0, 0, 1, 1], [], []>} : vector<152x64xbf16>, vector<64x32xbf16>, vector<152x32xf32> -> vector<152x32xf32>
    %40 = vector.broadcast %37 : vector<1x32xf32> to vector<152x32xf32>
    %41 = arith.addf %39, %40 : vector<152x32xf32>
    %cst_18 = arith.constant 0.000000e+00 : f32
    %42 = vector.broadcast %cst_18 : f32 to vector<152x32xf32>
    %43 = arith.maximumf %41, %42 : vector<152x32xf32>
    %c0_19 = arith.constant 0 : index
    %c0_20 = arith.constant 0 : index
    %44 = vector.load %arg8[%c0_19, %c0_20] : memref<32x32xbf16, #tpu.memory_space<vmem>>, vector<32x32xbf16>
    %c0_21 = arith.constant 0 : index
    %c0_22 = arith.constant 0 : index
    %45 = vector.load %arg9[%c0_21, %c0_22] : memref<1x32xf32, #tpu.memory_space<vmem>>, vector<1x32xf32>
    %46 = arith.truncf %43 : vector<152x32xf32> to vector<152x32xbf16>
    %cst_23 = arith.constant dense<0.000000e+00> : vector<152x32xf32>
    %47 = tpu.matmul %46, %44, %cst_23 {dimension_numbers = #tpu.dot_dimension_numbers<[1], [0], [0], [1], [0, 0, 1, 1], [], []>} : vector<152x32xbf16>, vector<32x32xbf16>, vector<152x32xf32> -> vector<152x32xf32>
    %48 = vector.broadcast %45 : vector<1x32xf32> to vector<152x32xf32>
    %49 = arith.addf %47, %48 : vector<152x32xf32>
    %cst_24 = arith.constant 0.000000e+00 : f32
    %50 = vector.broadcast %cst_24 : f32 to vector<152x32xf32>
    %51 = arith.maximumf %49, %50 : vector<152x32xf32>
    %c0_25 = arith.constant 0 : index
    %c0_26 = arith.constant 0 : index
    %52 = vector.load %arg10[%c0_25, %c0_26] : memref<32x16xbf16, #tpu.memory_space<vmem>>, vector<32x16xbf16>
    %c0_27 = arith.constant 0 : index
    %c0_28 = arith.constant 0 : index
    %53 = vector.load %arg11[%c0_27, %c0_28] : memref<1x16xf32, #tpu.memory_space<vmem>>, vector<1x16xf32>
    %54 = arith.truncf %51 : vector<152x32xf32> to vector<152x32xbf16>
    %cst_29 = arith.constant dense<0.000000e+00> : vector<152x16xf32>
    %55 = tpu.matmul %54, %52, %cst_29 {dimension_numbers = #tpu.dot_dimension_numbers<[1], [0], [0], [1], [0, 0, 1, 1], [], []>} : vector<152x32xbf16>, vector<32x16xbf16>, vector<152x16xf32> -> vector<152x16xf32>
    %56 = vector.broadcast %53 : vector<1x16xf32> to vector<152x16xf32>
    %57 = arith.addf %55, %56 : vector<152x16xf32>
    %cst_30 = arith.constant 0.000000e+00 : f32
    %58 = vector.broadcast %cst_30 : f32 to vector<152x16xf32>
    %59 = arith.maximumf %57, %58 : vector<152x16xf32>
    %c0_31 = arith.constant 0 : index
    %c0_32 = arith.constant 0 : index
    %60 = vector.load %arg12[%c0_31, %c0_32] : memref<16x2xbf16, #tpu.memory_space<vmem>>, vector<16x2xbf16>
    %c0_33 = arith.constant 0 : index
    %c0_34 = arith.constant 0 : index
    %61 = vector.load %arg13[%c0_33, %c0_34] : memref<1x2xf32, #tpu.memory_space<vmem>>, vector<1x2xf32>
    %62 = arith.truncf %59 : vector<152x16xf32> to vector<152x16xbf16>
    %cst_35 = arith.constant dense<0.000000e+00> : vector<152x2xf32>
    %63 = tpu.matmul %62, %60, %cst_35 {dimension_numbers = #tpu.dot_dimension_numbers<[1], [0], [0], [1], [0, 0, 1, 1], [], []>} : vector<152x16xbf16>, vector<16x2xbf16>, vector<152x2xf32> -> vector<152x2xf32>
    %64 = vector.broadcast %61 : vector<1x2xf32> to vector<152x2xf32>
    %65 = arith.addf %63, %64 : vector<152x2xf32>
    %c0_36 = arith.constant 0 : index
    %c0_37 = arith.constant 0 : index
    %66 = vector.load %arg14[%c0_36, %c0_37] : memref<152x2xf32, #tpu.memory_space<vmem>>, vector<152x2xf32>
    tpu.vector_store %arg14[%c0_36, %c0_37], %65 {strides = array<i32>} : memref<152x2xf32, #tpu.memory_space<vmem>>, vector<152x2xf32>,
    return
  }
  func.func @transform_0(%arg0: i32) -> (i32, i32) {
    %c0_i32 = arith.constant 0 : i32
    %c0_i32_0 = arith.constant 0 : i32
    return %arg0, %c0_i32 : i32, i32
  }
  func.func @transform_1(%arg0: i32) -> (i32, i32) {
    %c0_i32 = arith.constant 0 : i32
    %c0_i32_0 = arith.constant 0 : i32
    return %arg0, %c0_i32 : i32, i32
  }
  func.func @transform_2(%arg0: i32) -> (i32, i32) {
    %c0_i32 = arith.constant 0 : i32
    %c0_i32_0 = arith.constant 0 : i32
    %c0_i32_1 = arith.constant 0 : i32
    return %c0_i32, %c0_i32_0 : i32, i32
  }
  func.func @transform_3(%arg0: i32) -> (i32, i32) {
    %c0_i32 = arith.constant 0 : i32
    %c0_i32_0 = arith.constant 0 : i32
    %c0_i32_1 = arith.constant 0 : i32
    return %c0_i32, %c0_i32_0 : i32, i32
  }
  func.func @transform_4(%arg0: i32) -> (i32, i32) {
    %c0_i32 = arith.constant 0 : i32
    %c0_i32_0 = arith.constant 0 : i32
    %c0_i32_1 = arith.constant 0 : i32
    return %c0_i32, %c0_i32_0 : i32, i32
  }
  func.func @transform_5(%arg0: i32) -> (i32, i32) {
    %c0_i32 = arith.constant 0 : i32
    %c0_i32_0 = arith.constant 0 : i32
    %c0_i32_1 = arith.constant 0 : i32
    return %c0_i32, %c0_i32_0 : i32, i32
  }
  func.func @transform_6(%arg0: i32) -> (i32, i32) {
    %c0_i32 = arith.constant 0 : i32
    %c0_i32_0 = arith.constant 0 : i32
    %c0_i32_1 = arith.constant 0 : i32
    return %c0_i32, %c0_i32_0 : i32, i32
  }
  func.func @transform_7(%arg0: i32) -> (i32, i32) {
    %c0_i32 = arith.constant 0 : i32
    %c0_i32_0 = arith.constant 0 : i32
    %c0_i32_1 = arith.constant 0 : i32
    return %c0_i32, %c0_i32_0 : i32, i32
  }
  func.func @transform_8(%arg0: i32) -> (i32, i32) {
    %c0_i32 = arith.constant 0 : i32
    %c0_i32_0 = arith.constant 0 : i32
    %c0_i32_1 = arith.constant 0 : i32
    return %c0_i32, %c0_i32_0 : i32, i32
  }
  func.func @transform_9(%arg0: i32) -> (i32, i32) {
    %c0_i32 = arith.constant 0 : i32
    %c0_i32_0 = arith.constant 0 : i32
    %c0_i32_1 = arith.constant 0 : i32
    return %c0_i32, %c0_i32_0 : i32, i32
  }
  func.func @transform_10(%arg0: i32) -> (i32, i32) {
    %c0_i32 = arith.constant 0 : i32
    %c0_i32_0 = arith.constant 0 : i32
    %c0_i32_1 = arith.constant 0 : i32
    return %c0_i32, %c0_i32_0 : i32, i32
  }
  func.func @transform_11(%arg0: i32) -> (i32, i32) {
    %c0_i32 = arith.constant 0 : i32
    %c0_i32_0 = arith.constant 0 : i32
    %c0_i32_1 = arith.constant 0 : i32
    return %c0_i32, %c0_i32_0 : i32, i32
  }
  func.func @transform_12(%arg0: i32) -> (i32, i32) {
    %c0_i32 = arith.constant 0 : i32
    %c0_i32_0 = arith.constant 0 : i32
    %c0_i32_1 = arith.constant 0 : i32
    return %c0_i32, %c0_i32_0 : i32, i32
  }
  func.func @transform_13(%arg0: i32) -> (i32, i32) {
    %c0_i32 = arith.constant 0 : i32
    %c0_i32_0 = arith.constant 0 : i32
    return %arg0, %c0_i32 : i32, i32
  }
}

</mosaic_0001>

<llo_original>
// kernel: tpu_custom_call.1
$region0: #{tpu_custom_call.1}
  #allocation0 [shape = 'u32[]', space=smem, size = 0x4, offset = 0x4, fixed_abs, tag = 'smem constant byte address 0x4 - core index']
  #allocation1 [shape = 'u32[144,128]{1,0:T(1,128)}', space=vmem, size = 0x12000, scoped, tag = 'internal scratch']
  %s0 = inlined_call_operand.vmem [shape: s32[300,2], index: 0, kind: input, shape index: {}]
  %s1 = inlined_call_operand.vmem [shape: f32[300,8], index: 1, kind: input, shape index: {}]
  %s2 = inlined_call_operand.vmem [shape: bf16[12,64], index: 2, kind: input, shape index: {}]
  %s3 = inlined_call_operand.vmem [shape: bf16[8,64], index: 3, kind: input, shape index: {}]
  %s4 = inlined_call_operand.vmem [shape: f32[1,64], index: 4, kind: input, shape index: {}]
  %s5 = inlined_call_operand.vmem [shape: bf16[64,32], index: 5, kind: input, shape index: {}]
  %s6 = inlined_call_operand.vmem [shape: f32[1,32], index: 6, kind: input, shape index: {}]
  %s7 = inlined_call_operand.vmem [shape: bf16[32,32], index: 7, kind: input, shape index: {}]
  %s8 = inlined_call_operand.vmem [shape: f32[1,32], index: 8, kind: input, shape index: {}]
  %s9 = inlined_call_operand.vmem [shape: bf16[32,16], index: 9, kind: input, shape index: {}]
  %s10 = inlined_call_operand.vmem [shape: f32[1,16], index: 10, kind: input, shape index: {}]
  %s11 = inlined_call_operand.vmem [shape: bf16[16,2], index: 11, kind: input, shape index: {}]
  %s12 = inlined_call_operand.vmem [shape: f32[1,2], index: 12, kind: input, shape index: {}]
  %s13 = inlined_call_operand.vmem [shape: f32[300,2], index: 13, kind: output, shape index: {}]
  %s14 = sld [smem:[#allocation0]]
  $region85: #{tpu_custom_call.1} parent=0
    _
  %s16 = ssub.s32 1, %s14
  %s17 = scalar_select 0, %s16, %s14
  loop: start=0, step=1, limit=4
  $region2: #{tpu_custom_call.1} parent=0 // loop_pre_header
    _
  $region3: #{tpu_custom_call.1} parent=0 // loop_header
    %s19 = sphi 0, %s23
    %p20 = scmp.ge.s32.totalorder %s19, 4
    %s29 = sphi 0, %s31
    %s32 = sphi 0, %s29
    %s33 = sphi 0, %s32
    %s49 = sphi 0, %s33
    %s55 = sphi 0, %s57
    %s58 = sphi 0, %s55
    %s59 = sphi 0, %s58
    %s75 = sphi 0, %s59
    %s79 = sphi 0, %s79
    %s81 = sphi 0, %s79
    %s82 = sphi 0, %s81
    %s96 = sphi 0, %s82
    %s100 = sphi 0, %s100
    %s102 = sphi 0, %s100
    %s103 = sphi 0, %s102
    %s117 = sphi 0, %s103
    %s121 = sphi 0, %s121
    %s123 = sphi 0, %s121
    %s124 = sphi 0, %s123
    %s138 = sphi 0, %s124
    %s142 = sphi 0, %s142
    %s144 = sphi 0, %s142
    %s145 = sphi 0, %s144
    %s159 = sphi 0, %s145
    %s163 = sphi 0, %s163
    %s165 = sphi 0, %s163
    %s166 = sphi 0, %s165
    %s180 = sphi 0, %s166
    %s184 = sphi 0, %s184
    %s186 = sphi 0, %s184
    %s187 = sphi 0, %s186
    %s201 = sphi 0, %s187
    %s205 = sphi 0, %s205
    %s207 = sphi 0, %s205
    %s208 = sphi 0, %s207
    %s222 = sphi 0, %s208
    %s226 = sphi 0, %s226
    %s228 = sphi 0, %s226
    %s229 = sphi 0, %s228
    %s243 = sphi 0, %s229
    %s247 = sphi 0, %s247
    %s249 = sphi 0, %s247
    %s250 = sphi 0, %s249
    %s264 = sphi 0, %s250
    %s268 = sphi 0, %s268
    %s270 = sphi 0, %s268
    %s271 = sphi 0, %s270
    %s285 = sphi 0, %s271
    %s289 = sphi 0, %s289
    %s291 = sphi 0, %s289
    %s292 = sphi 0, %s291
    %s306 = sphi 0, %s292
    %s312 = sphi 0, %s314
    %s315 = sphi 0, %s312
    %s316 = sphi 0, %s315
    %s332 = sphi 0, %s316
  $region4: #{tpu_custom_call.1} parent=0 // loop_header_branch
    %22 = sbr.rel (%p20) target = $region8
  $region5: #{tpu_custom_call.1} parent=0 // loop_body
    %s24 = ssub.s32 %s19, 1
    %s25 = ssub.s32 %s19, 2
    %s26 = sadd.s32 %s19, 1
    %s27 = ssub.s32 %s19, %s26
    %p28 = scmp.eq.s32.totalorder %s27, 0
    %s30 = sadd.s32 %s29, 1
    %s31 = scalar_select %p28, %s29, %s30
    %p34 = pneg %p28
    %p35 = scmp.eq.s32.totalorder %s19, 1
    %p36 = por %p34, %p35
    %p37 = scmp.ne.s32.totalorder %s29, %s32
    %p38 = scmp.eq.s32.totalorder %s19, 0
    %p39 = por %p37, %p38
    %p40 = scmp.ne.s32.totalorder %s29, %s32
    %p41 = scmp.eq.s32.totalorder %s24, 1
    %p42 = por %p40, %p41
    %p43 = scmp.ne.s32.totalorder %s32, %s33
    %p44 = scmp.eq.s32.totalorder %s24, 0
    %p45 = por %p43, %p44
    %p46 = scmp.ne.s32.totalorder %s32, %s33
    %p47 = scmp.eq.s32.totalorder %s25, 1
    %p48 = por %p46, %p47
    %p50 = scmp.ne.s32.totalorder %s33, %s49
    %p51 = scmp.eq.s32.totalorder %s25, 0
    %p52 = por %p50, %p51
    %s53 = ssub.s32 %s19, %s26
    %p54 = scmp.eq.s32.totalorder %s53, 0
    %s56 = sadd.s32 %s55, 1
    %s57 = scalar_select %p54, %s55, %s56
    %p60 = pneg %p54
    %p61 = scmp.eq.s32.totalorder %s19, 1
    %p62 = por %p60, %p61
    %p63 = scmp.ne.s32.totalorder %s55, %s58
    %p64 = scmp.eq.s32.totalorder %s19, 0
    %p65 = por %p63, %p64
    %p66 = scmp.ne.s32.totalorder %s55, %s58
    %p67 = scmp.eq.s32.totalorder %s24, 1
    %p68 = por %p66, %p67
    %p69 = scmp.ne.s32.totalorder %s58, %s59
    %p70 = scmp.eq.s32.totalorder %s24, 0
    %p71 = por %p69, %p70
    %p72 = scmp.ne.s32.totalorder %s58, %s59
    %p73 = scmp.eq.s32.totalorder %s25, 1
    %p74 = por %p72, %p73
    %p76 = scmp.ne.s32.totalorder %s59, %s75
    %p77 = scmp.eq.s32.totalorder %s25, 0
    %p78 = por %p76, %p77
    %s80 = sadd.s32 %s79, 1
    %p83 = scmp.eq.s32.totalorder %s19, 1
    %p84 = scmp.ne.s32.totalorder %s79, %s81
    %p85 = scmp.eq.s32.totalorder %s19, 0
    %p86 = por %p84, %p85
    %p87 = scmp.ne.s32.totalorder %s79, %s81
    %p88 = scmp.eq.s32.totalorder %s24, 1
    %p89 = por %p87, %p88
    %p90 = scmp.ne.s32.totalorder %s81, %s82
    %p91 = scmp.eq.s32.totalorder %s24, 0
    %p92 = por %p90, %p91
    %p93 = scmp.ne.s32.totalorder %s81, %s82
    %p94 = scmp.eq.s32.totalorder %s25, 1
    %p95 = por %p93, %p94
    %p97 = scmp.ne.s32.totalorder %s82, %s96
    %p98 = scmp.eq.s32.totalorder %s25, 0
    %p99 = por %p97, %p98
    %s101 = sadd.s32 %s100, 1
    %p104 = scmp.eq.s32.totalorder %s19, 1
    %p105 = scmp.ne.s32.totalorder %s100, %s102
    %p106 = scmp.eq.s32.totalorder %s19, 0
    %p107 = por %p105, %p106
    %p108 = scmp.ne.s32.totalorder %s100, %s102
    %p109 = scmp.eq.s32.totalorder %s24, 1
    %p110 = por %p108, %p109
    %p111 = scmp.ne.s32.totalorder %s102, %s103
    %p112 = scmp.eq.s32.totalorder %s24, 0
    %p113 = por %p111, %p112
    %p114 = scmp.ne.s32.totalorder %s102, %s103
    %p115 = scmp.eq.s32.totalorder %s25, 1
    %p116 = por %p114, %p115
    %p118 = scmp.ne.s32.totalorder %s103, %s117
    %p119 = scmp.eq.s32.totalorder %s25, 0
    %p120 = por %p118, %p119
    %s122 = sadd.s32 %s121, 1
    %p125 = scmp.eq.s32.totalorder %s19, 1
    %p126 = scmp.ne.s32.totalorder %s121, %s123
    %p127 = scmp.eq.s32.totalorder %s19, 0
    %p128 = por %p126, %p127
    %p129 = scmp.ne.s32.totalorder %s121, %s123
    %p130 = scmp.eq.s32.totalorder %s24, 1
    %p131 = por %p129, %p130
    %p132 = scmp.ne.s32.totalorder %s123, %s124
    %p133 = scmp.eq.s32.totalorder %s24, 0
    %p134 = por %p132, %p133
    %p135 = scmp.ne.s32.totalorder %s123, %s124
    %p136 = scmp.eq.s32.totalorder %s25, 1
    %p137 = por %p135, %p136
    %p139 = scmp.ne.s32.totalorder %s124, %s138
    %p140 = scmp.eq.s32.totalorder %s25, 0
    %p141 = por %p139, %p140
    %s143 = sadd.s32 %s142, 1
    %p146 = scmp.eq.s32.totalorder %s19, 1
    %p147 = scmp.ne.s32.totalorder %s142, %s144
    %p148 = scmp.eq.s32.totalorder %s19, 0
    %p149 = por %p147, %p148
    %p150 = scmp.ne.s32.totalorder %s142, %s144
    %p151 = scmp.eq.s32.totalorder %s24, 1
    %p152 = por %p150, %p151
    %p153 = scmp.ne.s32.totalorder %s144, %s145
    %p154 = scmp.eq.s32.totalorder %s24, 0
    %p155 = por %p153, %p154
    %p156 = scmp.ne.s32.totalorder %s144, %s145
    %p157 = scmp.eq.s32.totalorder %s25, 1
    %p158 = por %p156, %p157
    %p160 = scmp.ne.s32.totalorder %s145, %s159
    %p161 = scmp.eq.s32.totalorder %s25, 0
    %p162 = por %p160, %p161
    %s164 = sadd.s32 %s163, 1
    %p167 = scmp.eq.s32.totalorder %s19, 1
    %p168 = scmp.ne.s32.totalorder %s163, %s165
    %p169 = scmp.eq.s32.totalorder %s19, 0
    %p170 = por %p168, %p169
    %p171 = scmp.ne.s32.totalorder %s163, %s165
    %p172 = scmp.eq.s32.totalorder %s24, 1
    %p173 = por %p171, %p172
    %p174 = scmp.ne.s32.totalorder %s165, %s166
    %p175 = scmp.eq.s32.totalorder %s24, 0
    %p176 = por %p174, %p175
    %p177 = scmp.ne.s32.totalorder %s165, %s166
    %p178 = scmp.eq.s32.totalorder %s25, 1
    %p179 = por %p177, %p178
    %p181 = scmp.ne.s32.totalorder %s166, %s180
    %p182 = scmp.eq.s32.totalorder %s25, 0
    %p183 = por %p181, %p182
    %s185 = sadd.s32 %s184, 1
    %p188 = scmp.eq.s32.totalorder %s19, 1
    %p189 = scmp.ne.s32.totalorder %s184, %s186
    %p190 = scmp.eq.s32.totalorder %s19, 0
    %p191 = por %p189, %p190
    %p192 = scmp.ne.s32.totalorder %s184, %s186
    %p193 = scmp.eq.s32.totalorder %s24, 1
    %p194 = por %p192, %p193
    %p195 = scmp.ne.s32.totalorder %s186, %s187
    %p196 = scmp.eq.s32.totalorder %s24, 0
    %p197 = por %p195, %p196
    %p198 = scmp.ne.s32.totalorder %s186, %s187
    %p199 = scmp.eq.s32.totalorder %s25, 1
    %p200 = por %p198, %p199
    %p202 = scmp.ne.s32.totalorder %s187, %s201
    %p203 = scmp.eq.s32.totalorder %s25, 0
    %p204 = por %p202, %p203
    %s206 = sadd.s32 %s205, 1
    %p209 = scmp.eq.s32.totalorder %s19, 1
    %p210 = scmp.ne.s32.totalorder %s205, %s207
    %p211 = scmp.eq.s32.totalorder %s19, 0
    %p212 = por %p210, %p211
    %p213 = scmp.ne.s32.totalorder %s205, %s207
    %p214 = scmp.eq.s32.totalorder %s24, 1
    %p215 = por %p213, %p214
    %p216 = scmp.ne.s32.totalorder %s207, %s208
    %p217 = scmp.eq.s32.totalorder %s24, 0
    %p218 = por %p216, %p217
    %p219 = scmp.ne.s32.totalorder %s207, %s208
    %p220 = scmp.eq.s32.totalorder %s25, 1
    %p221 = por %p219, %p220
    %p223 = scmp.ne.s32.totalorder %s208, %s222
    %p224 = scmp.eq.s32.totalorder %s25, 0
    %p225 = por %p223, %p224
    %s227 = sadd.s32 %s226, 1
    %p230 = scmp.eq.s32.totalorder %s19, 1
    %p231 = scmp.ne.s32.totalorder %s226, %s228
    %p232 = scmp.eq.s32.totalorder %s19, 0
    %p233 = por %p231, %p232
    %p234 = scmp.ne.s32.totalorder %s226, %s228
    %p235 = scmp.eq.s32.totalorder %s24, 1
    %p236 = por %p234, %p235
    %p237 = scmp.ne.s32.totalorder %s228, %s229
    %p238 = scmp.eq.s32.totalorder %s24, 0
    %p239 = por %p237, %p238
    %p240 = scmp.ne.s32.totalorder %s228, %s229
    %p241 = scmp.eq.s32.totalorder %s25, 1
    %p242 = por %p240, %p241
    %p244 = scmp.ne.s32.totalorder %s229, %s243
    %p245 = scmp.eq.s32.totalorder %s25, 0
    %p246 = por %p244, %p245
    %s248 = sadd.s32 %s247, 1
    %p251 = scmp.eq.s32.totalorder %s19, 1
    %p252 = scmp.ne.s32.totalorder %s247, %s249
    %p253 = scmp.eq.s32.totalorder %s19, 0
    %p254 = por %p252, %p253
    %p255 = scmp.ne.s32.totalorder %s247, %s249
    %p256 = scmp.eq.s32.totalorder %s24, 1
    %p257 = por %p255, %p256
    %p258 = scmp.ne.s32.totalorder %s249, %s250
    %p259 = scmp.eq.s32.totalorder %s24, 0
    %p260 = por %p258, %p259
    %p261 = scmp.ne.s32.totalorder %s249, %s250
    %p262 = scmp.eq.s32.totalorder %s25, 1
    %p263 = por %p261, %p262
    %p265 = scmp.ne.s32.totalorder %s250, %s264
    %p266 = scmp.eq.s32.totalorder %s25, 0
    %p267 = por %p265, %p266
    %s269 = sadd.s32 %s268, 1
    %p272 = scmp.eq.s32.totalorder %s19, 1
    %p273 = scmp.ne.s32.totalorder %s268, %s270
    %p274 = scmp.eq.s32.totalorder %s19, 0
    %p275 = por %p273, %p274
    %p276 = scmp.ne.s32.totalorder %s268, %s270
    %p277 = scmp.eq.s32.totalorder %s24, 1
    %p278 = por %p276, %p277
    %p279 = scmp.ne.s32.totalorder %s270, %s271
    %p280 = scmp.eq.s32.totalorder %s24, 0
    %p281 = por %p279, %p280
    %p282 = scmp.ne.s32.totalorder %s270, %s271
    %p283 = scmp.eq.s32.totalorder %s25, 1
    %p284 = por %p282, %p283
    %p286 = scmp.ne.s32.totalorder %s271, %s285
    %p287 = scmp.eq.s32.totalorder %s25, 0
    %p288 = por %p286, %p287
    %s290 = sadd.s32 %s289, 1
    %p293 = scmp.eq.s32.totalorder %s19, 1
    %p294 = scmp.ne.s32.totalorder %s289, %s291
    %p295 = scmp.eq.s32.totalorder %s19, 0
    %p296 = por %p294, %p295
    %p297 = scmp.ne.s32.totalorder %s289, %s291
    %p298 = scmp.eq.s32.totalorder %s24, 1
    %p299 = por %p297, %p298
    %p300 = scmp.ne.s32.totalorder %s291, %s292
    %p301 = scmp.eq.s32.totalorder %s24, 0
    %p302 = por %p300, %p301
    %p303 = scmp.ne.s32.totalorder %s291, %s292
    %p304 = scmp.eq.s32.totalorder %s25, 1
    %p305 = por %p303, %p304
    %p307 = scmp.ne.s32.totalorder %s292, %s306
    %p308 = scmp.eq.s32.totalorder %s25, 0
    %p309 = por %p307, %p308
    %s310 = ssub.s32 %s19, %s26
    %p311 = scmp.eq.s32.totalorder %s310, 0
    %s313 = sadd.s32 %s312, 1
    %s314 = scalar_select %p311, %s312, %s313
    %p317 = pneg %p311
    %p318 = scmp.eq.s32.totalorder %s19, 1
    %p319 = por %p317, %p318
    %p320 = scmp.ne.s32.totalorder %s312, %s315
    %p321 = scmp.eq.s32.totalorder %s19, 0
    %p322 = por %p320, %p321
    %p323 = scmp.ne.s32.totalorder %s312, %s315
    %p324 = scmp.eq.s32.totalorder %s24, 1
    %p325 = por %p323, %p324
    %p326 = scmp.ne.s32.totalorder %s315, %s316
    %p327 = scmp.eq.s32.totalorder %s24, 0
    %p328 = por %p326, %p327
    %p329 = scmp.ne.s32.totalorder %s315, %s316
    %p330 = scmp.eq.s32.totalorder %s25, 1
    %p331 = por %p329, %p330
    %p333 = scmp.ne.s32.totalorder %s316, %s332
    %p334 = scmp.eq.s32.totalorder %s25, 0
    %p335 = por %p333, %p334
    %p336 = scmp.le.s32.totalorder 1, %s19
    %p337 = scmp.lt.s32.totalorder %s19, 3
    %p338 = pnand %p336, %p337
    %p339 = pneg %p338
    // Predicated region
    $region9: #{tpu_custom_call.1} parent=5 // pred_check
      _
    $region10: #{tpu_custom_call.1} parent=5 // pred_check_branch
      %341 = sbr.rel (%p338) target = $region12
    $region11: #{tpu_custom_call.1} parent=5 // pred_region
      %s342 = ssub.s32 %s19, 1
      // Predicated region
      $region13: #{tpu_custom_call.1} parent=11 // pred_check
        %p343 = pneg %p92
      $region14: #{tpu_custom_call.1} parent=11 // pred_check_branch
        %345 = sbr.rel (%p343) target = $region16
      $region15: #{tpu_custom_call.1} parent=11 // pred_region
        _
      $region16: #{tpu_custom_call.1} parent=11 // pred_fallthru
        _
      // Predicated region
      $region17: #{tpu_custom_call.1} parent=11 // pred_check
        %p346 = pneg %p113
      $region18: #{tpu_custom_call.1} parent=11 // pred_check_branch
        %348 = sbr.rel (%p346) target = $region20
      $region19: #{tpu_custom_call.1} parent=11 // pred_region
        _
      $region20: #{tpu_custom_call.1} parent=11 // pred_fallthru
        _
      // Predicated region
      $region21: #{tpu_custom_call.1} parent=11 // pred_check
        %p349 = pneg %p134
      $region22: #{tpu_custom_call.1} parent=11 // pred_check_branch
        %351 = sbr.rel (%p349) target = $region24
      $region23: #{tpu_custom_call.1} parent=11 // pred_region
        _
      $region24: #{tpu_custom_call.1} parent=11 // pred_fallthru
        _
      // Predicated region
      $region25: #{tpu_custom_call.1} parent=11 // pred_check
        %p352 = pneg %p155
      $region26: #{tpu_custom_call.1} parent=11 // pred_check_branch
        %354 = sbr.rel (%p352) target = $region28
      $region27: #{tpu_custom_call.1} parent=11 // pred_region
        _
      $region28: #{tpu_custom_call.1} parent=11 // pred_fallthru
        _
      // Predicated region
      $region29: #{tpu_custom_call.1} parent=11 // pred_check
        %p355 = pneg %p176
      $region30: #{tpu_custom_call.1} parent=11 // pred_check_branch
        %357 = sbr.rel (%p355) target = $region32
      $region31: #{tpu_custom_call.1} parent=11 // pred_region
        _
      $region32: #{tpu_custom_call.1} parent=11 // pred_fallthru
        _
      // Predicated region
      $region33: #{tpu_custom_call.1} parent=11 // pred_check
        %p358 = pneg %p197
      $region34: #{tpu_custom_call.1} parent=11 // pred_check_branch
        %360 = sbr.rel (%p358) target = $region36
      $region35: #{tpu_custom_call.1} parent=11 // pred_region
        _
      $region36: #{tpu_custom_call.1} parent=11 // pred_fallthru
        _
      // Predicated region
      $region37: #{tpu_custom_call.1} parent=11 // pred_check
        %p361 = pneg %p218
      $region38: #{tpu_custom_call.1} parent=11 // pred_check_branch
        %363 = sbr.rel (%p361) target = $region40
      $region39: #{tpu_custom_call.1} parent=11 // pred_region
        _
      $region40: #{tpu_custom_call.1} parent=11 // pred_fallthru
        _
      // Predicated region
      $region41: #{tpu_custom_call.1} parent=11 // pred_check
        %p364 = pneg %p239
      $region42: #{tpu_custom_call.1} parent=11 // pred_check_branch
        %366 = sbr.rel (%p364) target = $region44
      $region43: #{tpu_custom_call.1} parent=11 // pred_region
        _
      $region44: #{tpu_custom_call.1} parent=11 // pred_fallthru
        _
      // Predicated region
      $region45: #{tpu_custom_call.1} parent=11 // pred_check
        %p367 = pneg %p260
      $region46: #{tpu_custom_call.1} parent=11 // pred_check_branch
        %369 = sbr.rel (%p367) target = $region48
      $region47: #{tpu_custom_call.1} parent=11 // pred_region
        _
      $region48: #{tpu_custom_call.1} parent=11 // pred_fallthru
        _
      // Predicated region
      $region49: #{tpu_custom_call.1} parent=11 // pred_check
        %p370 = pneg %p281
      $region50: #{tpu_custom_call.1} parent=11 // pred_check_branch
        %372 = sbr.rel (%p370) target = $region52
      $region51: #{tpu_custom_call.1} parent=11 // pred_region
        _
      $region52: #{tpu_custom_call.1} parent=11 // pred_fallthru
        _
      // Predicated region
      $region53: #{tpu_custom_call.1} parent=11 // pred_check
        %p373 = pneg %p302
      $region54: #{tpu_custom_call.1} parent=11 // pred_check_branch
        %375 = sbr.rel (%p373) target = $region56
      $region55: #{tpu_custom_call.1} parent=11 // pred_region
        _
      $region56: #{tpu_custom_call.1} parent=11 // pred_fallthru
        _
    $region12: #{tpu_custom_call.1} parent=5 // pred_fallthru
      _
    %p376 = scmp.lt.s32.totalorder %s19, 2
    // Predicated region
    $region57: #{tpu_custom_call.1} parent=5 // pred_check
      %p377 = pneg %p376
    $region58: #{tpu_custom_call.1} parent=5 // pred_check_branch
      %379 = sbr.rel (%p377) target = $region60
    $region59: #{tpu_custom_call.1} parent=5 // pred_region
      // Predicated region
      $region61: #{tpu_custom_call.1} parent=59 // pred_check
        %p380 = pneg %p39
      $region62: #{tpu_custom_call.1} parent=59 // pred_check_branch
        %382 = sbr.rel (%p380) target = $region64
      $region63: #{tpu_custom_call.1} parent=59 // pred_region
        %s383 = smul.u32 19, %s19
        %p384 = scmp.lt.s32.totalorder %s383, 37
        %s385 = scalar_select %p384, %s383, 37
        %s386 = smul.addr %s385, 8
        %s387 = scalar_lea.vmem %s0, %s386
        %s388 = smul.u32 19, %s19
      $region64: #{tpu_custom_call.1} parent=59 // pred_fallthru
        _
      // Predicated region
      $region65: #{tpu_custom_call.1} parent=59 // pred_check
        %p389 = pneg %p65
      $region66: #{tpu_custom_call.1} parent=59 // pred_check_branch
        %391 = sbr.rel (%p389) target = $region68
      $region67: #{tpu_custom_call.1} parent=59 // pred_region
        %s392 = smul.u32 19, %s19
        %p393 = scmp.lt.s32.totalorder %s392, 37
        %s394 = scalar_select %p393, %s392, 37
        %s395 = smul.addr %s394, 8
        %s396 = scalar_lea.vmem %s1, %s395
        %s397 = smul.u32 19, %s19
      $region68: #{tpu_custom_call.1} parent=59 // pred_fallthru
        _
    $region60: #{tpu_custom_call.1} parent=5 // pred_fallthru
      _
    %p398 = scmp.le.s32.totalorder 1, %s19
    %p399 = scmp.lt.s32.totalorder %s19, 3
    %p400 = pnand %p398, %p399
    %p401 = pneg %p400
    // Predicated region
    $region69: #{tpu_custom_call.1} parent=5 // pred_check
      _
    $region70: #{tpu_custom_call.1} parent=5 // pred_check_branch
      %403 = sbr.rel (%p400) target = $region72
    $region71: #{tpu_custom_call.1} parent=5 // pred_region
      %s404 = ssub.s32 %s19, 1
      %s405 = smul.u32 19, %s24
      %p406 = scmp.lt.s32.totalorder %s405, 37
      %s407 = scalar_select %p406, %s405, 37
      %s408 = smul.addr %s407, 8
      %s409 = scalar_lea.vmem %s0, %s408
      %p410 = pneg %p45
      %p411 = pneg %p42
      %s412 = smul.u32 19, %s24
      %p413 = scmp.lt.s32.totalorder %s412, 37
      %s414 = scalar_select %p413, %s412, 37
      %s415 = smul.addr %s414, 8
      %s416 = scalar_lea.vmem %s1, %s415
      %p417 = pneg %p71
      %p418 = pneg %p68
      %p419 = pneg %p92
      %p420 = pneg %p89
      %p421 = pneg %p113
      %p422 = pneg %p110
      %p423 = pneg %p134
      %p424 = pneg %p131
      %p425 = pneg %p155
      %p426 = pneg %p152
      %p427 = pneg %p176
      %p428 = pneg %p173
      %p429 = pneg %p197
      %p430 = pneg %p194
      %p431 = pneg %p218
      %p432 = pneg %p215
      %p433 = pneg %p239
      %p434 = pneg %p236
      %p435 = pneg %p260
      %p436 = pneg %p257
      %p437 = pneg %p281
      %p438 = pneg %p278
      %p439 = pneg %p302
      %p440 = pneg %p299
      %p441 = pneg %p328
      %p442 = pneg %p325
      %s443 = smul.u32 19, %s24
      %p444 = scmp.lt.s32.totalorder %s443, 37
      %s445 = scalar_select %p444, %s443, 37
      %s446 = smul.addr %s445, 8
      %s447 = scalar_lea.vmem %s13, %s446
      %s448 = smul.u32 19, %s24
      %p449 = scmp.lt.s32.totalorder %s448, 37
      %s450 = scalar_select %p449, %s448, 37
      %s451 = smul.addr %s450, 8
      %s452 = scalar_lea.vmem %s0, %s451
      %s453 = smul.u32 19, %s24
      %s454 = smul.u32 19, %s24
      %p455 = scmp.lt.s32.totalorder %s454, 37
      %s456 = scalar_select %p455, %s454, 37
      %s457 = smul.addr %s456, 8
      %s458 = scalar_lea.vmem %s1, %s457
      %s459 = smul.u32 19, %s24
      %s460 = smul.u32 19, %s24
      %p461 = scmp.lt.s32.totalorder %s460, 37
      %s462 = scalar_select %p461, %s460, 37
      %s463 = smul.addr %s462, 8
      %s464 = scalar_lea.vmem %s13, %s463
      %s465 = smul.u32 19, %s24
      %v467 = vld [vmem:[%s452] sm:$0xff]
      %v468 = vld [vmem:[%s452 + $0x8] sm:$0xff]
      %v469 = vld [vmem:[%s452 + $0x10] sm:$0xff]
      %v470 = vld [vmem:[%s452 + $0x18] sm:$0xff]
      %v471 = vld [vmem:[%s452 + $0x20] sm:$0xff]
      %v472 = vld [vmem:[%s452 + $0x28] sm:$0xff]
      %v473 = vld [vmem:[%s452 + $0x30] sm:$0xff]
      %v474 = vld [vmem:[%s452 + $0x38] sm:$0xff]
      %v475 = vld [vmem:[%s452 + $0x40] sm:$0xff]
      %v476 = vld [vmem:[%s452 + $0x48] sm:$0xff]
      %v477 = vld [vmem:[%s452 + $0x50] sm:$0xff]
      %v478 = vld [vmem:[%s452 + $0x58] sm:$0xff]
      %v479 = vld [vmem:[%s452 + $0x60] sm:$0xff]
      %v480 = vld [vmem:[%s452 + $0x68] sm:$0xff]
      %v481 = vld [vmem:[%s452 + $0x70] sm:$0xff]
      %v482 = vld [vmem:[%s452 + $0x78] sm:$0xff]
      %v483 = vld [vmem:[%s452 + $0x80] sm:$0xff]
      %v484 = vld [vmem:[%s452 + $0x88] sm:$0xff]
      %v485 = vld [vmem:[%s452 + $0x90] sm:$0xff]
      %v486 = vlaneseq
      %v487 = vand.u32 %v486, 127
      %vm488 = vcmp.gt.s32.totalorder %v467, 0
      %v489 = vsel %vm488, %v467, 0
      %vm490 = vcmp.gt.s32.totalorder %v468, 0
      %v491 = vsel %vm490, %v468, 0
      %vm492 = vcmp.gt.s32.totalorder %v469, 0
      %v493 = vsel %vm492, %v469, 0
      %vm494 = vcmp.gt.s32.totalorder %v470, 0
      %v495 = vsel %vm494, %v470, 0
      %vm496 = vcmp.gt.s32.totalorder %v471, 0
      %v497 = vsel %vm496, %v471, 0
      %vm498 = vcmp.gt.s32.totalorder %v472, 0
      %v499 = vsel %vm498, %v472, 0
      %vm500 = vcmp.gt.s32.totalorder %v473, 0
      %v501 = vsel %vm500, %v473, 0
      %vm502 = vcmp.gt.s32.totalorder %v474, 0
      %v503 = vsel %vm502, %v474, 0
      %vm504 = vcmp.gt.s32.totalorder %v475, 0
      %v505 = vsel %vm504, %v475, 0
      %vm506 = vcmp.gt.s32.totalorder %v476, 0
      %v507 = vsel %vm506, %v476, 0
      %vm508 = vcmp.gt.s32.totalorder %v477, 0
      %v509 = vsel %vm508, %v477, 0
      %vm510 = vcmp.gt.s32.totalorder %v478, 0
      %v511 = vsel %vm510, %v478, 0
      %vm512 = vcmp.gt.s32.totalorder %v479, 0
      %v513 = vsel %vm512, %v479, 0
      %vm514 = vcmp.gt.s32.totalorder %v480, 0
      %v515 = vsel %vm514, %v480, 0
      %vm516 = vcmp.gt.s32.totalorder %v481, 0
      %v517 = vsel %vm516, %v481, 0
      %vm518 = vcmp.gt.s32.totalorder %v482, 0
      %v519 = vsel %vm518, %v482, 0
      %vm520 = vcmp.gt.s32.totalorder %v483, 0
      %v521 = vsel %vm520, %v483, 0
      %vm522 = vcmp.gt.s32.totalorder %v484, 0
      %v523 = vsel %vm522, %v484, 0
      %vm524 = vcmp.gt.s32.totalorder %v485, 0
      %v525 = vsel %vm524, %v485, 0
      %vm526 = vcmp.lt.s32.totalorder %v489, 4
      %v527 = vsel %vm526, %v489, 4
      %vm528 = vcmp.lt.s32.totalorder %v491, 4
      %v529 = vsel %vm528, %v491, 4
      %vm530 = vcmp.lt.s32.totalorder %v493, 4
      %v531 = vsel %vm530, %v493, 4
      %vm532 = vcmp.lt.s32.totalorder %v495, 4
      %v533 = vsel %vm532, %v495, 4
      %vm534 = vcmp.lt.s32.totalorder %v497, 4
      %v535 = vsel %vm534, %v497, 4
      %vm536 = vcmp.lt.s32.totalorder %v499, 4
      %v537 = vsel %vm536, %v499, 4
      %vm538 = vcmp.lt.s32.totalorder %v501, 4
      %v539 = vsel %vm538, %v501, 4
      %vm540 = vcmp.lt.s32.totalorder %v503, 4
      %v541 = vsel %vm540, %v503, 4
      %vm542 = vcmp.lt.s32.totalorder %v505, 4
      %v543 = vsel %vm542, %v505, 4
      %vm544 = vcmp.lt.s32.totalorder %v507, 4
      %v545 = vsel %vm544, %v507, 4
      %vm546 = vcmp.lt.s32.totalorder %v509, 4
      %v547 = vsel %vm546, %v509, 4
      %vm548 = vcmp.lt.s32.totalorder %v511, 4
      %v549 = vsel %vm548, %v511, 4
      %vm550 = vcmp.lt.s32.totalorder %v513, 4
      %v551 = vsel %vm550, %v513, 4
      %vm552 = vcmp.lt.s32.totalorder %v515, 4
      %v553 = vsel %vm552, %v515, 4
      %vm554 = vcmp.lt.s32.totalorder %v517, 4
      %v555 = vsel %vm554, %v517, 4
      %vm556 = vcmp.lt.s32.totalorder %v519, 4
      %v557 = vsel %vm556, %v519, 4
      %vm558 = vcmp.lt.s32.totalorder %v521, 4
      %v559 = vsel %vm558, %v521, 4
      %vm560 = vcmp.lt.s32.totalorder %v523, 4
      %v561 = vsel %vm560, %v523, 4
      %vm562 = vcmp.lt.s32.totalorder %v525, 4
      %v563 = vsel %vm562, %v525, 4
      %564 = vset.pattern.permute.xlu0 0
      %565 = vperm.xlu0 %564, %v527
      %v566 = vpop.permute.xlu0 %565
      %567 = vset.pattern.permute.xlu0 0
      %568 = vperm.xlu0 %567, %v529
      %v569 = vpop.permute.xlu0 %568
      %570 = vset.pattern.permute.xlu0 0
      %571 = vperm.xlu0 %570, %v531
      %v572 = vpop.permute.xlu0 %571
      %573 = vset.pattern.permute.xlu0 0
      %574 = vperm.xlu0 %573, %v533
      %v575 = vpop.permute.xlu0 %574
      %576 = vset.pattern.permute.xlu0 0
      %577 = vperm.xlu0 %576, %v535
      %v578 = vpop.permute.xlu0 %577
      %579 = vset.pattern.permute.xlu0 0
      %580 = vperm.xlu0 %579, %v537
      %v581 = vpop.permute.xlu0 %580
      %582 = vset.pattern.permute.xlu0 0
      %583 = vperm.xlu0 %582, %v539
      %v584 = vpop.permute.xlu0 %583
      %585 = vset.pattern.permute.xlu0 0
      %586 = vperm.xlu0 %585, %v541
      %v587 = vpop.permute.xlu0 %586
      %588 = vset.pattern.permute.xlu0 0
      %589 = vperm.xlu0 %588, %v543
      %v590 = vpop.permute.xlu0 %589
      %591 = vset.pattern.permute.xlu0 0
      %592 = vperm.xlu0 %591, %v545
      %v593 = vpop.permute.xlu0 %592
      %594 = vset.pattern.permute.xlu0 0
      %595 = vperm.xlu0 %594, %v547
      %v596 = vpop.permute.xlu0 %595
      %597 = vset.pattern.permute.xlu0 0
      %598 = vperm.xlu0 %597, %v549
      %v599 = vpop.permute.xlu0 %598
      %600 = vset.pattern.permute.xlu0 0
      %601 = vperm.xlu0 %600, %v551
      %v602 = vpop.permute.xlu0 %601
      %603 = vset.pattern.permute.xlu0 0
      %604 = vperm.xlu0 %603, %v553
      %v605 = vpop.permute.xlu0 %604
      %606 = vset.pattern.permute.xlu0 0
      %607 = vperm.xlu0 %606, %v555
      %v608 = vpop.permute.xlu0 %607
      %609 = vset.pattern.permute.xlu0 0
      %610 = vperm.xlu0 %609, %v557
      %v611 = vpop.permute.xlu0 %610
      %612 = vset.pattern.permute.xlu0 0
      %613 = vperm.xlu0 %612, %v559
      %v614 = vpop.permute.xlu0 %613
      %615 = vset.pattern.permute.xlu0 0
      %616 = vperm.xlu0 %615, %v561
      %v617 = vpop.permute.xlu0 %616
      %618 = vset.pattern.permute.xlu0 0
      %619 = vperm.xlu0 %618, %v563
      %v620 = vpop.permute.xlu0 %619
      %vm621 = vcmp.eq.s32.totalorder %v487, %v566
      %vm622 = vcmp.eq.s32.totalorder %v487, %v569
      %vm623 = vcmp.eq.s32.totalorder %v487, %v572
      %vm624 = vcmp.eq.s32.totalorder %v487, %v575
      %vm625 = vcmp.eq.s32.totalorder %v487, %v578
      %vm626 = vcmp.eq.s32.totalorder %v487, %v581
      %vm627 = vcmp.eq.s32.totalorder %v487, %v584
      %vm628 = vcmp.eq.s32.totalorder %v487, %v587
      %vm629 = vcmp.eq.s32.totalorder %v487, %v590
      %vm630 = vcmp.eq.s32.totalorder %v487, %v593
      %vm631 = vcmp.eq.s32.totalorder %v487, %v596
      %vm632 = vcmp.eq.s32.totalorder %v487, %v599
      %vm633 = vcmp.eq.s32.totalorder %v487, %v602
      %vm634 = vcmp.eq.s32.totalorder %v487, %v605
      %vm635 = vcmp.eq.s32.totalorder %v487, %v608
      %vm636 = vcmp.eq.s32.totalorder %v487, %v611
      %vm637 = vcmp.eq.s32.totalorder %v487, %v614
      %vm638 = vcmp.eq.s32.totalorder %v487, %v617
      %vm639 = vcmp.eq.s32.totalorder %v487, %v620
      %vm640 = vcmp.lt.s32.totalorder %v489, 6
      %v641 = vsel %vm640, %v489, 6
      %vm642 = vcmp.lt.s32.totalorder %v491, 6
      %v643 = vsel %vm642, %v491, 6
      %vm644 = vcmp.lt.s32.totalorder %v493, 6
      %v645 = vsel %vm644, %v493, 6
      %vm646 = vcmp.lt.s32.totalorder %v495, 6
      %v647 = vsel %vm646, %v495, 6
      %vm648 = vcmp.lt.s32.totalorder %v497, 6
      %v649 = vsel %vm648, %v497, 6
      %vm650 = vcmp.lt.s32.totalorder %v499, 6
      %v651 = vsel %vm650, %v499, 6
      %vm652 = vcmp.lt.s32.totalorder %v501, 6
      %v653 = vsel %vm652, %v501, 6
      %vm654 = vcmp.lt.s32.totalorder %v503, 6
      %v655 = vsel %vm654, %v503, 6
      %vm656 = vcmp.lt.s32.totalorder %v505, 6
      %v657 = vsel %vm656, %v505, 6
      %vm658 = vcmp.lt.s32.totalorder %v507, 6
      %v659 = vsel %vm658, %v507, 6
      %vm660 = vcmp.lt.s32.totalorder %v509, 6
      %v661 = vsel %vm660, %v509, 6
      %vm662 = vcmp.lt.s32.totalorder %v511, 6
      %v663 = vsel %vm662, %v511, 6
      %vm664 = vcmp.lt.s32.totalorder %v513, 6
      %v665 = vsel %vm664, %v513, 6
      %vm666 = vcmp.lt.s32.totalorder %v515, 6
      %v667 = vsel %vm666, %v515, 6
      %vm668 = vcmp.lt.s32.totalorder %v517, 6
      %v669 = vsel %vm668, %v517, 6
      %vm670 = vcmp.lt.s32.totalorder %v519, 6
      %v671 = vsel %vm670, %v519, 6
      %vm672 = vcmp.lt.s32.totalorder %v521, 6
      %v673 = vsel %vm672, %v521, 6
      %vm674 = vcmp.lt.s32.totalorder %v523, 6
      %v675 = vsel %vm674, %v523, 6
      %vm676 = vcmp.lt.s32.totalorder %v525, 6
      %v677 = vsel %vm676, %v525, 6
      %v678 = vadd.s32 %v641, 5
      %v679 = vadd.s32 %v643, 5
      %v680 = vadd.s32 %v645, 5
      %v681 = vadd.s32 %v647, 5
      %v682 = vadd.s32 %v649, 5
      %v683 = vadd.s32 %v651, 5
      %v684 = vadd.s32 %v653, 5
      %v685 = vadd.s32 %v655, 5
      %v686 = vadd.s32 %v657, 5
      %v687 = vadd.s32 %v659, 5
      %v688 = vadd.s32 %v661, 5
      %v689 = vadd.s32 %v663, 5
      %v690 = vadd.s32 %v665, 5
      %v691 = vadd.s32 %v667, 5
      %v692 = vadd.s32 %v669, 5
      %v693 = vadd.s32 %v671, 5
      %v694 = vadd.s32 %v673, 5
      %v695 = vadd.s32 %v675, 5
      %v696 = vadd.s32 %v677, 5
      %697 = vset.pattern.permute.xlu0 1
      %698 = vperm.xlu0 %697, %v678
      %v699 = vpop.permute.xlu0 %698
      %700 = vset.pattern.permute.xlu0 1
      %701 = vperm.xlu0 %700, %v679
      %v702 = vpop.permute.xlu0 %701
      %703 = vset.pattern.permute.xlu0 1
      %704 = vperm.xlu0 %703, %v680
      %v705 = vpop.permute.xlu0 %704
      %706 = vset.pattern.permute.xlu0 1
      %707 = vperm.xlu0 %706, %v681
      %v708 = vpop.permute.xlu0 %707
      %709 = vset.pattern.permute.xlu0 1
      %710 = vperm.xlu0 %709, %v682
      %v711 = vpop.permute.xlu0 %710
      %712 = vset.pattern.permute.xlu0 1
      %713 = vperm.xlu0 %712, %v683
      %v714 = vpop.permute.xlu0 %713
      %715 = vset.pattern.permute.xlu0 1
      %716 = vperm.xlu0 %715, %v684
      %v717 = vpop.permute.xlu0 %716
      %718 = vset.pattern.permute.xlu0 1
      %719 = vperm.xlu0 %718, %v685
      %v720 = vpop.permute.xlu0 %719
      %721 = vset.pattern.permute.xlu0 1
      %722 = vperm.xlu0 %721, %v686
      %v723 = vpop.permute.xlu0 %722
      %724 = vset.pattern.permute.xlu0 1
      %725 = vperm.xlu0 %724, %v687
      %v726 = vpop.permute.xlu0 %725
      %727 = vset.pattern.permute.xlu0 1
      %728 = vperm.xlu0 %727, %v688
      %v729 = vpop.permute.xlu0 %728
      %730 = vset.pattern.permute.xlu0 1
      %731 = vperm.xlu0 %730, %v689
      %v732 = vpop.permute.xlu0 %731
      %733 = vset.pattern.permute.xlu0 1
      %734 = vperm.xlu0 %733, %v690
      %v735 = vpop.permute.xlu0 %734
      %736 = vset.pattern.permute.xlu0 1
      %737 = vperm.xlu0 %736, %v691
      %v738 = vpop.permute.xlu0 %737
      %739 = vset.pattern.permute.xlu0 1
      %740 = vperm.xlu0 %739, %v692
      %v741 = vpop.permute.xlu0 %740
      %742 = vset.pattern.permute.xlu0 1
      %743 = vperm.xlu0 %742, %v693
      %v744 = vpop.permute.xlu0 %743
      %745 = vset.pattern.permute.xlu0 1
      %746 = vperm.xlu0 %745, %v694
      %v747 = vpop.permute.xlu0 %746
      %748 = vset.pattern.permute.xlu0 1
      %749 = vperm.xlu0 %748, %v695
      %v750 = vpop.permute.xlu0 %749
      %751 = vset.pattern.permute.xlu0 1
      %752 = vperm.xlu0 %751, %v696
      %v753 = vpop.permute.xlu0 %752
      %vm754 = vcmp.eq.s32.totalorder %v487, %v699
      %vm755 = vcmp.eq.s32.totalorder %v487, %v702
      %vm756 = vcmp.eq.s32.totalorder %v487, %v705
      %vm757 = vcmp.eq.s32.totalorder %v487, %v708
      %vm758 = vcmp.eq.s32.totalorder %v487, %v711
      %vm759 = vcmp.eq.s32.totalorder %v487, %v714
      %vm760 = vcmp.eq.s32.totalorder %v487, %v717
      %vm761 = vcmp.eq.s32.totalorder %v487, %v720
      %vm762 = vcmp.eq.s32.totalorder %v487, %v723
      %vm763 = vcmp.eq.s32.totalorder %v487, %v726
      %vm764 = vcmp.eq.s32.totalorder %v487, %v729
      %vm765 = vcmp.eq.s32.totalorder %v487, %v732
      %vm766 = vcmp.eq.s32.totalorder %v487, %v735
      %vm767 = vcmp.eq.s32.totalorder %v487, %v738
      %vm768 = vcmp.eq.s32.totalorder %v487, %v741
      %vm769 = vcmp.eq.s32.totalorder %v487, %v744
      %vm770 = vcmp.eq.s32.totalorder %v487, %v747
      %vm771 = vcmp.eq.s32.totalorder %v487, %v750
      %vm772 = vcmp.eq.s32.totalorder %v487, %v753
      %vm773 = vmor %vm621, %vm754
      %vm774 = vmor %vm622, %vm755
      %vm775 = vmor %vm623, %vm756
      %vm776 = vmor %vm624, %vm757
      %vm777 = vmor %vm625, %vm758
      %vm778 = vmor %vm626, %vm759
      %vm779 = vmor %vm627, %vm760
      %vm780 = vmor %vm628, %vm761
      %vm781 = vmor %vm629, %vm762
      %vm782 = vmor %vm630, %vm763
      %vm783 = vmor %vm631, %vm764
      %vm784 = vmor %vm632, %vm765
      %vm785 = vmor %vm633, %vm766
      %vm786 = vmor %vm634, %vm767
      %vm787 = vmor %vm635, %vm768
      %vm788 = vmor %vm636, %vm769
      %vm789 = vmor %vm637, %vm770
      %vm790 = vmor %vm638, %vm771
      %vm791 = vmor %vm639, %vm772
      %v792 = vsel %vm773, 1, 0
      %v793 = vsel %vm774, 1, 0
      %v794 = vsel %vm775, 1, 0
      %v795 = vsel %vm776, 1, 0
      %v796 = vsel %vm777, 1, 0
      %v797 = vsel %vm778, 1, 0
      %v798 = vsel %vm779, 1, 0
      %v799 = vsel %vm780, 1, 0
      %v800 = vsel %vm781, 1, 0
      %v801 = vsel %vm782, 1, 0
      %v802 = vsel %vm783, 1, 0
      %v803 = vsel %vm784, 1, 0
      %v804 = vsel %vm785, 1, 0
      %v805 = vsel %vm786, 1, 0
      %v806 = vsel %vm787, 1, 0
      %v807 = vsel %vm788, 1, 0
      %v808 = vsel %vm789, 1, 0
      %v809 = vsel %vm790, 1, 0
      %v810 = vsel %vm791, 1, 0
      %v811 = vcvt.s32.f32 %v792
      %v812 = vcvt.s32.f32 %v793
      %v813 = vcvt.s32.f32 %v794
      %v814 = vcvt.s32.f32 %v795
      %v815 = vcvt.s32.f32 %v796
      %v816 = vcvt.s32.f32 %v797
      %v817 = vcvt.s32.f32 %v798
      %v818 = vcvt.s32.f32 %v799
      %v819 = vcvt.s32.f32 %v800
      %v820 = vcvt.s32.f32 %v801
      %v821 = vcvt.s32.f32 %v802
      %v822 = vcvt.s32.f32 %v803
      %v823 = vcvt.s32.f32 %v804
      %v824 = vcvt.s32.f32 %v805
      %v825 = vcvt.s32.f32 %v806
      %v826 = vcvt.s32.f32 %v807
      %v827 = vcvt.s32.f32 %v808
      %v828 = vcvt.s32.f32 %v809
      %v829 = vcvt.s32.f32 %v810
      %v830 = vpack.c.bf16 %v812, %v811
      %v831 = vpack.c.bf16 %v814, %v813
      %v832 = vpack.c.bf16 %v816, %v815
      %v833 = vpack.c.bf16 %v818, %v817
      %v834 = vpack.c.bf16 %v820, %v819
      %v835 = vpack.c.bf16 %v822, %v821
      %v836 = vpack.c.bf16 %v824, %v823
      %v837 = vpack.c.bf16 %v826, %v825
      %v838 = vpack.c.bf16 %v828, %v827
      %v839 = vpack.c.bf16 %v829, %v829
      %v840 = vld [vmem:[%s2] sm:$0xf]
      %v841 = vld [vmem:[%s2 + $0x4] sm:$0x3]
      %v842 = vld [vmem:[%s458] sm:$0xff]
      %v843 = vld [vmem:[%s458 + $0x8] sm:$0xff]
      %v844 = vld [vmem:[%s458 + $0x10] sm:$0xff]
      %v845 = vld [vmem:[%s458 + $0x18] sm:$0xff]
      %v846 = vld [vmem:[%s458 + $0x20] sm:$0xff]
      %v847 = vld [vmem:[%s458 + $0x28] sm:$0xff]
      %v848 = vld [vmem:[%s458 + $0x30] sm:$0xff]
      %v849 = vld [vmem:[%s458 + $0x38] sm:$0xff]
      %v850 = vld [vmem:[%s458 + $0x40] sm:$0xff]
      %v851 = vld [vmem:[%s458 + $0x48] sm:$0xff]
      %v852 = vld [vmem:[%s458 + $0x50] sm:$0xff]
      %v853 = vld [vmem:[%s458 + $0x58] sm:$0xff]
      %v854 = vld [vmem:[%s458 + $0x60] sm:$0xff]
      %v855 = vld [vmem:[%s458 + $0x68] sm:$0xff]
      %v856 = vld [vmem:[%s458 + $0x70] sm:$0xff]
      %v857 = vld [vmem:[%s458 + $0x78] sm:$0xff]
      %v858 = vld [vmem:[%s458 + $0x80] sm:$0xff]
      %v859 = vld [vmem:[%s458 + $0x88] sm:$0xff]
      %v860 = vld [vmem:[%s458 + $0x90] sm:$0xff]
      %v861 = vpack.c.bf16 %v843, %v842
      %v862 = vpack.c.bf16 %v845, %v844
      %v863 = vpack.c.bf16 %v847, %v846
      %v864 = vpack.c.bf16 %v849, %v848
      %v865 = vpack.c.bf16 %v851, %v850
      %v866 = vpack.c.bf16 %v853, %v852
      %v867 = vpack.c.bf16 %v855, %v854
      %v868 = vpack.c.bf16 %v857, %v856
      %v869 = vpack.c.bf16 %v859, %v858
      %v870 = vpack.c.bf16 %v860, %v860
      %v871 = vld [vmem:[%s3] sm:$0xf]
      %vm872 = vcmask 64512
      %v874 = vsel %vm872, %v861, 0
      %v877 = vsel %vm872, %v862, 0
      %v880 = vsel %vm872, %v863, 0
      %v883 = vsel %vm872, %v864, 0
      %v886 = vsel %vm872, %v865, 0
      %v889 = vsel %vm872, %v866, 0
      %v892 = vsel %vm872, %v867, 0
      %v895 = vsel %vm872, %v868, 0
      %v898 = vsel %vm872, %v869, 0
      %v901 = vsel %vm872, %v870, 0
      %vm903 = vcmask 1043456
      %v905 = vsel %vm903, %v871, 0
      %907 = vmatprep.subr.bf16.mxu0 0
      %908 = vmatpush1.bf16.msra.mxu0 %v905
      %909 = vmatprep.subr.bf16.mxu0 0
      %910 = vmatpush1.bf16.msra.mxu0 0
      %911 = vmatprep.subr.bf16.mxu0 0
      %912 = vmatpush1.bf16.msra.mxu0 0
      %913 = vmatprep.subr.bf16.mxu0 0
      %914 = vmatpush1.bf16.msra.mxu0 0
      %915 = vmatprep.subr.bf16.mxu0 0
      %916 = vmatpush1.bf16.msra.mxu0 0
      %917 = vmatprep.subr.bf16.mxu0 0
      %918 = vmatpush1.bf16.msra.mxu0 0
      %919 = vmatprep.subr.bf16.mxu0 0
      %920 = vmatpush1.bf16.msra.mxu0 0
      %921 = vmatprep.subr.bf16.mxu0 0
      %922 = vmatpush1.bf16.msra.mxu0 0
      %923 = vmatprep.subr.bf16.mxu0 0
      %924 = vmatpush1.bf16.msra.mxu0 0
      %925 = vmatprep.subr.bf16.mxu0 0
      %926 = vmatpush1.bf16.msra.mxu0 0
      %927 = vmatprep.subr.bf16.mxu0 0
      %928 = vmatpush1.bf16.msra.mxu0 0
      %929 = vmatprep.subr.bf16.mxu0 0
      %930 = vmatpush1.bf16.msra.mxu0 0
      %931 = vmatprep.subr.bf16.mxu0 0
      %932 = vmatpush1.bf16.msra.mxu0 0
      %933 = vmatprep.subr.bf16.mxu0 0
      %934 = vmatpush1.bf16.msra.mxu0 0
      %935 = vmatprep.subr.bf16.mxu0 0
      %936 = vmatpush1.bf16.msra.mxu0 0
      %937 = vmatprep.subr.bf16.mxu0 0
      %938 = vmatpush1.bf16.msra.mxu0 0
      %939 = vmatprep.mubr.bf16.mxu0 0
      %940 = vmatmul.mubr.bf16.gmra.mrb[0].mxu0 %v874
      %v941 = vpop.f32.mrb[0].mxu0
      %v942 = vadd.f32 0.0, %v941
      %v943 = vpop.f32.mrb[0].mxu0
      %v944 = vpop.f32.mrb[0].mxu0
      %v945 = vadd.f32 0.0, %v944
      %v946 = vpop.f32.mrb[0].mxu0
      %947 = vmatprep.mubr.bf16.mxu0 0
      %948 = vmatmul.mubr.bf16.gmra.mrb[0].mxu0 %v877
      %v949 = vpop.f32.mrb[0].mxu0
      %v950 = vadd.f32 0.0, %v949
      %v951 = vpop.f32.mrb[0].mxu0
      %v952 = vpop.f32.mrb[0].mxu0
      %v953 = vadd.f32 0.0, %v952
      %v954 = vpop.f32.mrb[0].mxu0
      %955 = vmatprep.mubr.bf16.mxu0 0
      %956 = vmatmul.mubr.bf16.gmra.mrb[0].mxu0 %v880
      %v957 = vpop.f32.mrb[0].mxu0
      %v958 = vadd.f32 0.0, %v957
      %v959 = vpop.f32.mrb[0].mxu0
      %v960 = vpop.f32.mrb[0].mxu0
      %v961 = vadd.f32 0.0, %v960
      %v962 = vpop.f32.mrb[0].mxu0
      %963 = vmatprep.mubr.bf16.mxu0 0
      %964 = vmatmul.mubr.bf16.gmra.mrb[0].mxu0 %v883
      %v965 = vpop.f32.mrb[0].mxu0
      %v966 = vadd.f32 0.0, %v965
      %v967 = vpop.f32.mrb[0].mxu0
      %v968 = vpop.f32.mrb[0].mxu0
      %v969 = vadd.f32 0.0, %v968
      %v970 = vpop.f32.mrb[0].mxu0
      %971 = vmatprep.mubr.bf16.mxu0 0
      %972 = vmatmul.mubr.bf16.gmra.mrb[0].mxu0 %v886
      %v973 = vpop.f32.mrb[0].mxu0
      %v974 = vadd.f32 0.0, %v973
      %v975 = vpop.f32.mrb[0].mxu0
      %v976 = vpop.f32.mrb[0].mxu0
      %v977 = vadd.f32 0.0, %v976
      %v978 = vpop.f32.mrb[0].mxu0
      %979 = vmatprep.mubr.bf16.mxu0 0
      %980 = vmatmul.mubr.bf16.gmra.mrb[0].mxu0 %v889
      %v981 = vpop.f32.mrb[0].mxu0
      %v982 = vadd.f32 0.0, %v981
      %v983 = vpop.f32.mrb[0].mxu0
      %v984 = vpop.f32.mrb[0].mxu0
      %v985 = vadd.f32 0.0, %v984
      %v986 = vpop.f32.mrb[0].mxu0
      %987 = vmatprep.mubr.bf16.mxu0 0
      %988 = vmatmul.mubr.bf16.gmra.mrb[0].mxu0 %v892
      %v989 = vpop.f32.mrb[0].mxu0
      %v990 = vadd.f32 0.0, %v989
      %v991 = vpop.f32.mrb[0].mxu0
      %v992 = vpop.f32.mrb[0].mxu0
      %v993 = vadd.f32 0.0, %v992
      %v994 = vpop.f32.mrb[0].mxu0
      %995 = vmatprep.mubr.bf16.mxu0 0
      %996 = vmatmul.mubr.bf16.gmra.mrb[0].mxu0 %v895
      %v997 = vpop.f32.mrb[0].mxu0
      %v998 = vadd.f32 0.0, %v997
      %v999 = vpop.f32.mrb[0].mxu0
      %v1000 = vpop.f32.mrb[0].mxu0
      %v1001 = vadd.f32 0.0, %v1000
      %v1002 = vpop.f32.mrb[0].mxu0
      %1003 = vmatprep.mubr.bf16.mxu0 0
      %1004 = vmatmul.mubr.bf16.gmra.mrb[0].mxu0 %v898
      %v1005 = vpop.f32.mrb[0].mxu0
      %v1006 = vadd.f32 0.0, %v1005
      %v1007 = vpop.f32.mrb[0].mxu0
      %v1008 = vpop.f32.mrb[0].mxu0
      %v1009 = vadd.f32 0.0, %v1008
      %v1010 = vpop.f32.mrb[0].mxu0
      %1011 = vmatprep.mubr.bf16.mxu0 0
      %1012 = vmatmul.mubr.bf16.gmra.mrb[0].mxu0 %v901
      %v1013 = vpop.f32.mrb[0].mxu0
      %v1014 = vadd.f32 0.0, %v1013
      %v1015 = vpop.f32.mrb[0].mxu0
      %v1016 = vpop.f32.mrb[0].mxu0
      %v1017 = vpop.f32.mrb[0].mxu0
      %1018 = vdwg.mxu0
      %v1021 = vunpack.c.l.b16 %v840
      %v1022 = vunpack.c.l.b16 %v841
      %v1023 = vpack.c.b16 %v1022, %v1021
      %vm1024 = vcmask 97280
      %v1026 = vsel %vm1024, %v830, 0
      %v1029 = vsel %vm1024, %v831, 0
      %v1032 = vsel %vm1024, %v832, 0
      %v1035 = vsel %vm1024, %v833, 0
      %v1038 = vsel %vm1024, %v834, 0
      %v1041 = vsel %vm1024, %v835, 0
      %v1044 = vsel %vm1024, %v836, 0
      %v1047 = vsel %vm1024, %v837, 0
      %v1050 = vsel %vm1024, %v838, 0
      %v1053 = vsel %vm1024, %v839, 0
      %vm1055 = vcmask 1045504
      %v1057 = vsel %vm1055, %v1023, 0
      %1059 = vmatprep.subr.bf16.mxu0 0
      %1060 = vmatpush1.bf16.msra.mxu0 %v1057
      %1061 = vmatprep.subr.bf16.mxu0 0
      %1062 = vmatpush1.bf16.msra.mxu0 0
      %1063 = vmatprep.subr.bf16.mxu0 0
      %1064 = vmatpush1.bf16.msra.mxu0 0
      %1065 = vmatprep.subr.bf16.mxu0 0
      %1066 = vmatpush1.bf16.msra.mxu0 0
      %1067 = vmatprep.subr.bf16.mxu0 0
      %1068 = vmatpush1.bf16.msra.mxu0 0
      %1069 = vmatprep.subr.bf16.mxu0 0
      %1070 = vmatpush1.bf16.msra.mxu0 0
      %1071 = vmatprep.subr.bf16.mxu0 0
      %1072 = vmatpush1.bf16.msra.mxu0 0
      %1073 = vmatprep.subr.bf16.mxu0 0
      %1074 = vmatpush1.bf16.msra.mxu0 0
      %1075 = vmatprep.subr.bf16.mxu0 0
      %1076 = vmatpush1.bf16.msra.mxu0 0
      %1077 = vmatprep.subr.bf16.mxu0 0
      %1078 = vmatpush1.bf16.msra.mxu0 0
      %1079 = vmatprep.subr.bf16.mxu0 0
      %1080 = vmatpush1.bf16.msra.mxu0 0
      %1081 = vmatprep.subr.bf16.mxu0 0
      %1082 = vmatpush1.bf16.msra.mxu0 0
      %1083 = vmatprep.subr.bf16.mxu0 0
      %1084 = vmatpush1.bf16.msra.mxu0 0
      %1085 = vmatprep.subr.bf16.mxu0 0
      %1086 = vmatpush1.bf16.msra.mxu0 0
      %1087 = vmatprep.subr.bf16.mxu0 0
      %1088 = vmatpush1.bf16.msra.mxu0 0
      %1089 = vmatprep.subr.bf16.mxu0 0
      %1090 = vmatpush1.bf16.msra.mxu0 0
      %1091 = vmatprep.mubr.bf16.mxu0 0
      %1092 = vmatmul.mubr.bf16.gmra.mrb[0].mxu0 %v1026
      %v1093 = vpop.f32.mrb[0].mxu0
      %v1094 = vadd.f32 %v942, %v1093
      %v1095 = vpop.f32.mrb[0].mxu0
      %v1096 = vpop.f32.mrb[0].mxu0
      %v1097 = vadd.f32 %v945, %v1096
      %v1098 = vpop.f32.mrb[0].mxu0
      %1099 = vmatprep.mubr.bf16.mxu0 0
      %1100 = vmatmul.mubr.bf16.gmra.mrb[0].mxu0 %v1029
      %v1101 = vpop.f32.mrb[0].mxu0
      %v1102 = vadd.f32 %v950, %v1101
      %v1103 = vpop.f32.mrb[0].mxu0
      %v1104 = vpop.f32.mrb[0].mxu0
      %v1105 = vadd.f32 %v953, %v1104
      %v1106 = vpop.f32.mrb[0].mxu0
      %1107 = vmatprep.mubr.bf16.mxu0 0
      %1108 = vmatmul.mubr.bf16.gmra.mrb[0].mxu0 %v1032
      %v1109 = vpop.f32.mrb[0].mxu0
      %v1110 = vadd.f32 %v958, %v1109
      %v1111 = vpop.f32.mrb[0].mxu0
      %v1112 = vpop.f32.mrb[0].mxu0
      %v1113 = vadd.f32 %v961, %v1112
      %v1114 = vpop.f32.mrb[0].mxu0
      %1115 = vmatprep.mubr.bf16.mxu0 0
      %1116 = vmatmul.mubr.bf16.gmra.mrb[0].mxu0 %v1035
      %v1117 = vpop.f32.mrb[0].mxu0
      %v1118 = vadd.f32 %v966, %v1117
      %v1119 = vpop.f32.mrb[0].mxu0
      %v1120 = vpop.f32.mrb[0].mxu0
      %v1121 = vadd.f32 %v969, %v1120
      %v1122 = vpop.f32.mrb[0].mxu0
      %1123 = vmatprep.mubr.bf16.mxu0 0
      %1124 = vmatmul.mubr.bf16.gmra.mrb[0].mxu0 %v1038
      %v1125 = vpop.f32.mrb[0].mxu0
      %v1126 = vadd.f32 %v974, %v1125
      %v1127 = vpop.f32.mrb[0].mxu0
      %v1128 = vpop.f32.mrb[0].mxu0
      %v1129 = vadd.f32 %v977, %v1128
      %v1130 = vpop.f32.mrb[0].mxu0
      %1131 = vmatprep.mubr.bf16.mxu0 0
      %1132 = vmatmul.mubr.bf16.gmra.mrb[0].mxu0 %v1041
      %v1133 = vpop.f32.mrb[0].mxu0
      %v1134 = vadd.f32 %v982, %v1133
      %v1135 = vpop.f32.mrb[0].mxu0
      %v1136 = vpop.f32.mrb[0].mxu0
      %v1137 = vadd.f32 %v985, %v1136
      %v1138 = vpop.f32.mrb[0].mxu0
      %1139 = vmatprep.mubr.bf16.mxu0 0
      %1140 = vmatmul.mubr.bf16.gmra.mrb[0].mxu0 %v1044
      %v1141 = vpop.f32.mrb[0].mxu0
      %v1142 = vadd.f32 %v990, %v1141
      %v1143 = vpop.f32.mrb[0].mxu0
      %v1144 = vpop.f32.mrb[0].mxu0
      %v1145 = vadd.f32 %v993, %v1144
      %v1146 = vpop.f32.mrb[0].mxu0
      %1147 = vmatprep.mubr.bf16.mxu0 0
      %1148 = vmatmul.mubr.bf16.gmra.mrb[0].mxu0 %v1047
      %v1149 = vpop.f32.mrb[0].mxu0
      %v1150 = vadd.f32 %v998, %v1149
      %v1151 = vpop.f32.mrb[0].mxu0
      %v1152 = vpop.f32.mrb[0].mxu0
      %v1153 = vadd.f32 %v1001, %v1152
      %v1154 = vpop.f32.mrb[0].mxu0
      %1155 = vmatprep.mubr.bf16.mxu0 0
      %1156 = vmatmul.mubr.bf16.gmra.mrb[0].mxu0 %v1050
      %v1157 = vpop.f32.mrb[0].mxu0
      %v1158 = vadd.f32 %v1006, %v1157
      %v1159 = vpop.f32.mrb[0].mxu0
      %v1160 = vpop.f32.mrb[0].mxu0
      %v1161 = vadd.f32 %v1009, %v1160
      %v1162 = vpop.f32.mrb[0].mxu0
      %1163 = vmatprep.mubr.bf16.mxu0 0
      %1164 = vmatmul.mubr.bf16.gmra.mrb[0].mxu0 %v1053
      %v1165 = vpop.f32.mrb[0].mxu0
      %v1166 = vadd.f32 %v1014, %v1165
      %v1167 = vpop.f32.mrb[0].mxu0
      %v1168 = vpop.f32.mrb[0].mxu0
      %v1169 = vpop.f32.mrb[0].mxu0
      %1170 = vdwg.mxu0
      %v1171 = vld [vmem:[%s4] sm:$0x1]
      %v1173 = vlaneseq
      %v1174 = vshrl.u32 %v1173, 7
      %v1175 = vsub.s32 0, %v1174
      %v1176 = vrot.slane %v1171, %v1175
      %v1178 = vadd.f32 %v1094, %v1176
      %v1179 = vadd.f32 %v1097, %v1176
      %v1180 = vadd.f32 %v1102, %v1176
      %v1181 = vadd.f32 %v1105, %v1176
      %v1182 = vadd.f32 %v1110, %v1176
      %v1183 = vadd.f32 %v1113, %v1176
      %v1184 = vadd.f32 %v1118, %v1176
      %v1185 = vadd.f32 %v1121, %v1176
      %v1186 = vadd.f32 %v1126, %v1176
      %v1187 = vadd.f32 %v1129, %v1176
      %v1188 = vadd.f32 %v1134, %v1176
      %v1189 = vadd.f32 %v1137, %v1176
      %v1190 = vadd.f32 %v1142, %v1176
      %v1191 = vadd.f32 %v1145, %v1176
      %v1192 = vadd.f32 %v1150, %v1176
      %v1193 = vadd.f32 %v1153, %v1176
      %v1194 = vadd.f32 %v1158, %v1176
      %v1195 = vadd.f32 %v1161, %v1176
      %v1196 = vadd.f32 %v1166, %v1176
      %v1197 = vmax.f32 %v1178, 0.0
      %v1198 = vmax.f32 %v1179, 0.0
      %v1199 = vmax.f32 %v1180, 0.0
      %v1200 = vmax.f32 %v1181, 0.0
      %v1201 = vmax.f32 %v1182, 0.0
      %v1202 = vmax.f32 %v1183, 0.0
      %v1203 = vmax.f32 %v1184, 0.0
      %v1204 = vmax.f32 %v1185, 0.0
      %v1205 = vmax.f32 %v1186, 0.0
      %v1206 = vmax.f32 %v1187, 0.0
      %v1207 = vmax.f32 %v1188, 0.0
      %v1208 = vmax.f32 %v1189, 0.0
      %v1209 = vmax.f32 %v1190, 0.0
      %v1210 = vmax.f32 %v1191, 0.0
      %v1211 = vmax.f32 %v1192, 0.0
      %v1212 = vmax.f32 %v1193, 0.0
      %v1213 = vmax.f32 %v1194, 0.0
      %v1214 = vmax.f32 %v1195, 0.0
      %v1215 = vmax.f32 %v1196, 0.0
      %v1216 = vld [vmem:[%s5] sm:$0xf]
      %v1217 = vld [vmem:[%s5 + $0x4] sm:$0xf]
      %v1218 = vld [vmem:[%s5 + $0x8] sm:$0xf]
      %v1219 = vld [vmem:[%s5 + $0xc] sm:$0xf]
      %v1220 = vld [vmem:[%s5 + $0x10] sm:$0xf]
      %v1221 = vld [vmem:[%s5 + $0x14] sm:$0xf]
      %v1222 = vld [vmem:[%s5 + $0x18] sm:$0xf]
      %v1223 = vld [vmem:[%s5 + $0x1c] sm:$0xf]
      %v1224 = vld [vmem:[%s6] sm:$0x1]
      %v1225 = vpack.c.bf16 %v1198, %v1197
      %v1226 = vpack.c.bf16 %v1200, %v1199
      %v1227 = vpack.c.bf16 %v1202, %v1201
      %v1228 = vpack.c.bf16 %v1204, %v1203
      %v1229 = vpack.c.bf16 %v1206, %v1205
      %v1230 = vpack.c.bf16 %v1208, %v1207
      %v1231 = vpack.c.bf16 %v1210, %v1209
      %v1232 = vpack.c.bf16 %v1212, %v1211
      %v1233 = vpack.c.bf16 %v1214, %v1213
      %v1234 = vpack.c.bf16 %v1215, %v1215
      %v1236 = vlaneseq
      %v1237 = vshrl.u32 %v1236, 7
      %v1238 = vsub.s32 0, %v1237
      %v1239 = vrot.slane %v1224, %v1238
      %v1249 = vunpack.c.l.b16 %v1216
      %v1250 = vunpack.c.l.b16 %v1217
      %v1251 = vunpack.c.l.b16 %v1218
      %v1252 = vunpack.c.l.b16 %v1219
      %v1253 = vunpack.c.l.b16 %v1220
      %v1254 = vunpack.c.l.b16 %v1221
      %v1255 = vunpack.c.l.b16 %v1222
      %v1256 = vunpack.c.l.b16 %v1223
      %v1257 = vpack.c.b16 %v1250, %v1249
      %v1258 = vpack.c.b16 %v1252, %v1251
      %v1259 = vpack.c.b16 %v1254, %v1253
      %v1260 = vpack.c.b16 %v1256, %v1255
      %vm1265 = vcmask 523264
      %v1267 = vsel %vm1265, %v1225, 0
      %v1270 = vsel %vm1265, %v1226, 0
      %v1273 = vsel %vm1265, %v1227, 0
      %v1276 = vsel %vm1265, %v1228, 0
      %v1279 = vsel %vm1265, %v1229, 0
      %v1282 = vsel %vm1265, %v1230, 0
      %v1285 = vsel %vm1265, %v1231, 0
      %v1288 = vsel %vm1265, %v1232, 0
      %v1291 = vsel %vm1265, %v1233, 0
      %v1294 = vsel %vm1265, %v1234, 0
      %1296 = vmatprep.subr.bf16.mxu0 0
      %1297 = vmatpush1.bf16.msra.mxu0 %v1257
      %1298 = vmatprep.subr.bf16.mxu0 0
      %1299 = vmatpush1.bf16.msra.mxu0 %v1258
      %1300 = vmatprep.subr.bf16.mxu0 0
      %1301 = vmatpush1.bf16.msra.mxu0 %v1259
      %1302 = vmatprep.subr.bf16.mxu0 0
      %1303 = vmatpush1.bf16.msra.mxu0 %v1260
      %1304 = vmatprep.subr.bf16.mxu0 0
      %1305 = vmatpush1.bf16.msra.mxu0 0
      %1306 = vmatprep.subr.bf16.mxu0 0
      %1307 = vmatpush1.bf16.msra.mxu0 0
      %1308 = vmatprep.subr.bf16.mxu0 0
      %1309 = vmatpush1.bf16.msra.mxu0 0
      %1310 = vmatprep.subr.bf16.mxu0 0
      %1311 = vmatpush1.bf16.msra.mxu0 0
      %1312 = vmatprep.subr.bf16.mxu0 0
      %1313 = vmatpush1.bf16.msra.mxu0 0
      %1314 = vmatprep.subr.bf16.mxu0 0
      %1315 = vmatpush1.bf16.msra.mxu0 0
      %1316 = vmatprep.subr.bf16.mxu0 0
      %1317 = vmatpush1.bf16.msra.mxu0 0
      %1318 = vmatprep.subr.bf16.mxu0 0
      %1319 = vmatpush1.bf16.msra.mxu0 0
      %1320 = vmatprep.subr.bf16.mxu0 0
      %1321 = vmatpush1.bf16.msra.mxu0 0
      %1322 = vmatprep.subr.bf16.mxu0 0
      %1323 = vmatpush1.bf16.msra.mxu0 0
      %1324 = vmatprep.subr.bf16.mxu0 0
      %1325 = vmatpush1.bf16.msra.mxu0 0
      %1326 = vmatprep.subr.bf16.mxu0 0
      %1327 = vmatpush1.bf16.msra.mxu0 0
      %1328 = vmatprep.mubr.bf16.mxu0 0
      %1329 = vmatmul.mubr.bf16.gmra.mrb[0].mxu0 %v1267
      %v1330 = vpop.f32.mrb[0].mxu0
      %v1331 = vadd.f32 %v1239, %v1330
      %v1332 = vpop.f32.mrb[0].mxu0
      %v1333 = vpop.f32.mrb[0].mxu0
      %v1334 = vadd.f32 %v1239, %v1333
      %v1335 = vpop.f32.mrb[0].mxu0
      %1336 = vmatprep.mubr.bf16.mxu0 0
      %1337 = vmatmul.mubr.bf16.gmra.mrb[0].mxu0 %v1270
      %v1338 = vpop.f32.mrb[0].mxu0
      %v1339 = vadd.f32 %v1239, %v1338
      %v1340 = vpop.f32.mrb[0].mxu0
      %v1341 = vpop.f32.mrb[0].mxu0
      %v1342 = vadd.f32 %v1239, %v1341
      %v1343 = vpop.f32.mrb[0].mxu0
      %1344 = vmatprep.mubr.bf16.mxu0 0
      %1345 = vmatmul.mubr.bf16.gmra.mrb[0].mxu0 %v1273
      %v1346 = vpop.f32.mrb[0].mxu0
      %v1347 = vadd.f32 %v1239, %v1346
      %v1348 = vpop.f32.mrb[0].mxu0
      %v1349 = vpop.f32.mrb[0].mxu0
      %v1350 = vadd.f32 %v1239, %v1349
      %v1351 = vpop.f32.mrb[0].mxu0
      %1352 = vmatprep.mubr.bf16.mxu0 0
      %1353 = vmatmul.mubr.bf16.gmra.mrb[0].mxu0 %v1276
      %v1354 = vpop.f32.mrb[0].mxu0
      %v1355 = vadd.f32 %v1239, %v1354
      %v1356 = vpop.f32.mrb[0].mxu0
      %v1357 = vpop.f32.mrb[0].mxu0
      %v1358 = vadd.f32 %v1239, %v1357
      %v1359 = vpop.f32.mrb[0].mxu0
      %1360 = vmatprep.mubr.bf16.mxu0 0
      %1361 = vmatmul.mubr.bf16.gmra.mrb[0].mxu0 %v1279
      %v1362 = vpop.f32.mrb[0].mxu0
      %v1363 = vadd.f32 %v1239, %v1362
      %v1364 = vpop.f32.mrb[0].mxu0
      %v1365 = vpop.f32.mrb[0].mxu0
      %v1366 = vadd.f32 %v1239, %v1365
      %v1367 = vpop.f32.mrb[0].mxu0
      %1368 = vmatprep.mubr.bf16.mxu0 0
      %1369 = vmatmul.mubr.bf16.gmra.mrb[0].mxu0 %v1282
      %v1370 = vpop.f32.mrb[0].mxu0
      %v1371 = vadd.f32 %v1239, %v1370
      %v1372 = vpop.f32.mrb[0].mxu0
      %v1373 = vpop.f32.mrb[0].mxu0
      %v1374 = vadd.f32 %v1239, %v1373
      %v1375 = vpop.f32.mrb[0].mxu0
      %1376 = vmatprep.mubr.bf16.mxu0 0
      %1377 = vmatmul.mubr.bf16.gmra.mrb[0].mxu0 %v1285
      %v1378 = vpop.f32.mrb[0].mxu0
      %v1379 = vadd.f32 %v1239, %v1378
      %v1380 = vpop.f32.mrb[0].mxu0
      %v1381 = vpop.f32.mrb[0].mxu0
      %v1382 = vadd.f32 %v1239, %v1381
      %v1383 = vpop.f32.mrb[0].mxu0
      %1384 = vmatprep.mubr.bf16.mxu0 0
      %1385 = vmatmul.mubr.bf16.gmra.mrb[0].mxu0 %v1288
      %v1386 = vpop.f32.mrb[0].mxu0
      %v1387 = vadd.f32 %v1239, %v1386
      %v1388 = vpop.f32.mrb[0].mxu0
      %v1389 = vpop.f32.mrb[0].mxu0
      %v1390 = vadd.f32 %v1239, %v1389
      %v1391 = vpop.f32.mrb[0].mxu0
      %1392 = vmatprep.mubr.bf16.mxu0 0
      %1393 = vmatmul.mubr.bf16.gmra.mrb[0].mxu0 %v1291
      %v1394 = vpop.f32.mrb[0].mxu0
      %v1395 = vadd.f32 %v1239, %v1394
      %v1396 = vpop.f32.mrb[0].mxu0
      %v1397 = vpop.f32.mrb[0].mxu0
      %v1398 = vadd.f32 %v1239, %v1397
      %v1399 = vpop.f32.mrb[0].mxu0
      %1400 = vmatprep.mubr.bf16.mxu0 0
      %1401 = vmatmul.mubr.bf16.gmra.mrb[0].mxu0 %v1294
      %v1402 = vpop.f32.mrb[0].mxu0
      %v1403 = vadd.f32 %v1239, %v1402
      %v1404 = vpop.f32.mrb[0].mxu0
      %v1405 = vpop.f32.mrb[0].mxu0
      %v1406 = vpop.f32.mrb[0].mxu0
      %1407 = vdwg.mxu0
      %v1408 = vmax.f32 %v1331, 0.0
      %v1409 = vmax.f32 %v1334, 0.0
      %v1410 = vmax.f32 %v1339, 0.0
      %v1411 = vmax.f32 %v1342, 0.0
      %v1412 = vmax.f32 %v1347, 0.0
      %v1413 = vmax.f32 %v1350, 0.0
      %v1414 = vmax.f32 %v1355, 0.0
      %v1415 = vmax.f32 %v1358, 0.0
      %v1416 = vmax.f32 %v1363, 0.0
      %v1417 = vmax.f32 %v1366, 0.0
      %v1418 = vmax.f32 %v1371, 0.0
      %v1419 = vmax.f32 %v1374, 0.0
      %v1420 = vmax.f32 %v1379, 0.0
      %v1421 = vmax.f32 %v1382, 0.0
      %v1422 = vmax.f32 %v1387, 0.0
      %v1423 = vmax.f32 %v1390, 0.0
      %v1424 = vmax.f32 %v1395, 0.0
      %v1425 = vmax.f32 %v1398, 0.0
      %v1426 = vmax.f32 %v1403, 0.0
      %v1427 = vld [vmem:[%s7] sm:$0xf]
      %v1428 = vld [vmem:[%s7 + $0x4] sm:$0xf]
      %v1429 = vld [vmem:[%s7 + $0x8] sm:$0xf]
      %v1430 = vld [vmem:[%s7 + $0xc] sm:$0xf]
      %v1431 = vld [vmem:[%s8] sm:$0x1]
      %v1432 = vpack.c.bf16 %v1409, %v1408
      %v1433 = vpack.c.bf16 %v1411, %v1410
      %v1434 = vpack.c.bf16 %v1413, %v1412
      %v1435 = vpack.c.bf16 %v1415, %v1414
      %v1436 = vpack.c.bf16 %v1417, %v1416
      %v1437 = vpack.c.bf16 %v1419, %v1418
      %v1438 = vpack.c.bf16 %v1421, %v1420
      %v1439 = vpack.c.bf16 %v1423, %v1422
      %v1440 = vpack.c.bf16 %v1425, %v1424
      %v1441 = vpack.c.bf16 %v1426, %v1426
      %v1443 = vlaneseq
      %v1444 = vshrl.u32 %v1443, 7
      %v1445 = vsub.s32 0, %v1444
      %v1446 = vrot.slane %v1431, %v1445
      %v1452 = vunpack.c.l.b16 %v1427
      %v1453 = vunpack.c.l.b16 %v1428
      %v1454 = vunpack.c.l.b16 %v1429
      %v1455 = vunpack.c.l.b16 %v1430
      %v1456 = vpack.c.b16 %v1453, %v1452
      %v1457 = vpack.c.b16 %v1455, %v1454
      %vm1460 = vcmask 261120
      %v1462 = vsel %vm1460, %v1432, 0
      %v1465 = vsel %vm1460, %v1433, 0
      %v1468 = vsel %vm1460, %v1434, 0
      %v1471 = vsel %vm1460, %v1435, 0
      %v1474 = vsel %vm1460, %v1436, 0
      %v1477 = vsel %vm1460, %v1437, 0
      %v1480 = vsel %vm1460, %v1438, 0
      %v1483 = vsel %vm1460, %v1439, 0
      %v1486 = vsel %vm1460, %v1440, 0
      %v1489 = vsel %vm1460, %v1441, 0
      %1491 = vmatprep.subr.bf16.mxu0 0
      %1492 = vmatpush1.bf16.msra.mxu0 %v1456
      %1493 = vmatprep.subr.bf16.mxu0 0
      %1494 = vmatpush1.bf16.msra.mxu0 %v1457
      %1495 = vmatprep.subr.bf16.mxu0 0
      %1496 = vmatpush1.bf16.msra.mxu0 0
      %1497 = vmatprep.subr.bf16.mxu0 0
      %1498 = vmatpush1.bf16.msra.mxu0 0
      %1499 = vmatprep.subr.bf16.mxu0 0
      %1500 = vmatpush1.bf16.msra.mxu0 0
      %1501 = vmatprep.subr.bf16.mxu0 0
      %1502 = vmatpush1.bf16.msra.mxu0 0
      %1503 = vmatprep.subr.bf16.mxu0 0
      %1504 = vmatpush1.bf16.msra.mxu0 0
      %1505 = vmatprep.subr.bf16.mxu0 0
      %1506 = vmatpush1.bf16.msra.mxu0 0
      %1507 = vmatprep.subr.bf16.mxu0 0
      %1508 = vmatpush1.bf16.msra.mxu0 0
      %1509 = vmatprep.subr.bf16.mxu0 0
      %1510 = vmatpush1.bf16.msra.mxu0 0
      %1511 = vmatprep.subr.bf16.mxu0 0
      %1512 = vmatpush1.bf16.msra.mxu0 0
      %1513 = vmatprep.subr.bf16.mxu0 0
      %1514 = vmatpush1.bf16.msra.mxu0 0
      %1515 = vmatprep.subr.bf16.mxu0 0
      %1516 = vmatpush1.bf16.msra.mxu0 0
      %1517 = vmatprep.subr.bf16.mxu0 0
      %1518 = vmatpush1.bf16.msra.mxu0 0
      %1519 = vmatprep.subr.bf16.mxu0 0
      %1520 = vmatpush1.bf16.msra.mxu0 0
      %1521 = vmatprep.subr.bf16.mxu0 0
      %1522 = vmatpush1.bf16.msra.mxu0 0
      %1523 = vmatprep.mubr.bf16.mxu0 0
      %1524 = vmatmul.mubr.bf16.gmra.mrb[0].mxu0 %v1462
      %v1525 = vpop.f32.mrb[0].mxu0
      %v1526 = vadd.f32 %v1446, %v1525
      %v1527 = vpop.f32.mrb[0].mxu0
      %v1528 = vpop.f32.mrb[0].mxu0
      %v1529 = vadd.f32 %v1446, %v1528
      %v1530 = vpop.f32.mrb[0].mxu0
      %1531 = vmatprep.mubr.bf16.mxu0 0
      %1532 = vmatmul.mubr.bf16.gmra.mrb[0].mxu0 %v1465
      %v1533 = vpop.f32.mrb[0].mxu0
      %v1534 = vadd.f32 %v1446, %v1533
      %v1535 = vpop.f32.mrb[0].mxu0
      %v1536 = vpop.f32.mrb[0].mxu0
      %v1537 = vadd.f32 %v1446, %v1536
      %v1538 = vpop.f32.mrb[0].mxu0
      %1539 = vmatprep.mubr.bf16.mxu0 0
      %1540 = vmatmul.mubr.bf16.gmra.mrb[0].mxu0 %v1468
      %v1541 = vpop.f32.mrb[0].mxu0
      %v1542 = vadd.f32 %v1446, %v1541
      %v1543 = vpop.f32.mrb[0].mxu0
      %v1544 = vpop.f32.mrb[0].mxu0
      %v1545 = vadd.f32 %v1446, %v1544
      %v1546 = vpop.f32.mrb[0].mxu0
      %1547 = vmatprep.mubr.bf16.mxu0 0
      %1548 = vmatmul.mubr.bf16.gmra.mrb[0].mxu0 %v1471
      %v1549 = vpop.f32.mrb[0].mxu0
      %v1550 = vadd.f32 %v1446, %v1549
      %v1551 = vpop.f32.mrb[0].mxu0
      %v1552 = vpop.f32.mrb[0].mxu0
      %v1553 = vadd.f32 %v1446, %v1552
      %v1554 = vpop.f32.mrb[0].mxu0
      %1555 = vmatprep.mubr.bf16.mxu0 0
      %1556 = vmatmul.mubr.bf16.gmra.mrb[0].mxu0 %v1474
      %v1557 = vpop.f32.mrb[0].mxu0
      %v1558 = vadd.f32 %v1446, %v1557
      %v1559 = vpop.f32.mrb[0].mxu0
      %v1560 = vpop.f32.mrb[0].mxu0
      %v1561 = vadd.f32 %v1446, %v1560
      %v1562 = vpop.f32.mrb[0].mxu0
      %1563 = vmatprep.mubr.bf16.mxu0 0
      %1564 = vmatmul.mubr.bf16.gmra.mrb[0].mxu0 %v1477
      %v1565 = vpop.f32.mrb[0].mxu0
      %v1566 = vadd.f32 %v1446, %v1565
      %v1567 = vpop.f32.mrb[0].mxu0
      %v1568 = vpop.f32.mrb[0].mxu0
      %v1569 = vadd.f32 %v1446, %v1568
      %v1570 = vpop.f32.mrb[0].mxu0
      %1571 = vmatprep.mubr.bf16.mxu0 0
      %1572 = vmatmul.mubr.bf16.gmra.mrb[0].mxu0 %v1480
      %v1573 = vpop.f32.mrb[0].mxu0
      %v1574 = vadd.f32 %v1446, %v1573
      %v1575 = vpop.f32.mrb[0].mxu0
      %v1576 = vpop.f32.mrb[0].mxu0
      %v1577 = vadd.f32 %v1446, %v1576
      %v1578 = vpop.f32.mrb[0].mxu0
      %1579 = vmatprep.mubr.bf16.mxu0 0
      %1580 = vmatmul.mubr.bf16.gmra.mrb[0].mxu0 %v1483
      %v1581 = vpop.f32.mrb[0].mxu0
      %v1582 = vadd.f32 %v1446, %v1581
      %v1583 = vpop.f32.mrb[0].mxu0
      %v1584 = vpop.f32.mrb[0].mxu0
      %v1585 = vadd.f32 %v1446, %v1584
      %v1586 = vpop.f32.mrb[0].mxu0
      %1587 = vmatprep.mubr.bf16.mxu0 0
      %1588 = vmatmul.mubr.bf16.gmra.mrb[0].mxu0 %v1486
      %v1589 = vpop.f32.mrb[0].mxu0
      %v1590 = vadd.f32 %v1446, %v1589
      %v1591 = vpop.f32.mrb[0].mxu0
      %v1592 = vpop.f32.mrb[0].mxu0
      %v1593 = vadd.f32 %v1446, %v1592
      %v1594 = vpop.f32.mrb[0].mxu0
      %1595 = vmatprep.mubr.bf16.mxu0 0
      %1596 = vmatmul.mubr.bf16.gmra.mrb[0].mxu0 %v1489
      %v1597 = vpop.f32.mrb[0].mxu0
      %v1598 = vadd.f32 %v1446, %v1597
      %v1599 = vpop.f32.mrb[0].mxu0
      %v1600 = vpop.f32.mrb[0].mxu0
      %v1601 = vpop.f32.mrb[0].mxu0
      %1602 = vdwg.mxu0
      %v1603 = vmax.f32 %v1526, 0.0
      %v1604 = vmax.f32 %v1529, 0.0
      %v1605 = vmax.f32 %v1534, 0.0
      %v1606 = vmax.f32 %v1537, 0.0
      %v1607 = vmax.f32 %v1542, 0.0
      %v1608 = vmax.f32 %v1545, 0.0
      %v1609 = vmax.f32 %v1550, 0.0
      %v1610 = vmax.f32 %v1553, 0.0
      %v1611 = vmax.f32 %v1558, 0.0
      %v1612 = vmax.f32 %v1561, 0.0
      %v1613 = vmax.f32 %v1566, 0.0
      %v1614 = vmax.f32 %v1569, 0.0
      %v1615 = vmax.f32 %v1574, 0.0
      %v1616 = vmax.f32 %v1577, 0.0
      %v1617 = vmax.f32 %v1582, 0.0
      %v1618 = vmax.f32 %v1585, 0.0
      %v1619 = vmax.f32 %v1590, 0.0
      %v1620 = vmax.f32 %v1593, 0.0
      %v1621 = vmax.f32 %v1598, 0.0
      %v1622 = vld [vmem:[%s9] sm:$0xf]
      %v1623 = vld [vmem:[%s9 + $0x4] sm:$0xf]
      %v1624 = vld [vmem:[%s9 + $0x8] sm:$0xf]
      %v1625 = vld [vmem:[%s9 + $0xc] sm:$0xf]
      %v1626 = vld [vmem:[%s10] sm:$0x1]
      %v1627 = vpack.c.bf16 %v1604, %v1603
      %v1628 = vpack.c.bf16 %v1606, %v1605
      %v1629 = vpack.c.bf16 %v1608, %v1607
      %v1630 = vpack.c.bf16 %v1610, %v1609
      %v1631 = vpack.c.bf16 %v1612, %v1611
      %v1632 = vpack.c.bf16 %v1614, %v1613
      %v1633 = vpack.c.bf16 %v1616, %v1615
      %v1634 = vpack.c.bf16 %v1618, %v1617
      %v1635 = vpack.c.bf16 %v1620, %v1619
      %v1636 = vpack.c.bf16 %v1621, %v1621
      %v1638 = vlaneseq
      %v1639 = vshrl.u32 %v1638, 7
      %v1640 = vsub.s32 0, %v1639
      %v1641 = vrot.slane %v1626, %v1640
      %v1647 = vunpack.c.l.b16 %v1622
      %v1648 = vunpack.c.l.b16 %v1623
      %v1649 = vunpack.c.l.b16 %v1624
      %v1650 = vunpack.c.l.b16 %v1625
      %v1651 = vpack.c.b16 %v1648, %v1647
      %v1652 = vpack.c.b16 %v1650, %v1649
      %v1656 = vsel %vm1460, %v1627, 0
      %v1659 = vsel %vm1460, %v1628, 0
      %v1662 = vsel %vm1460, %v1629, 0
      %v1665 = vsel %vm1460, %v1630, 0
      %v1668 = vsel %vm1460, %v1631, 0
      %v1671 = vsel %vm1460, %v1632, 0
      %v1674 = vsel %vm1460, %v1633, 0
      %v1677 = vsel %vm1460, %v1634, 0
      %v1680 = vsel %vm1460, %v1635, 0
      %v1683 = vsel %vm1460, %v1636, 0
      %1685 = vmatprep.subr.bf16.mxu0 0
      %1686 = vmatpush1.bf16.msra.mxu0 %v1651
      %1687 = vmatprep.subr.bf16.mxu0 0
      %1688 = vmatpush1.bf16.msra.mxu0 %v1652
      %1689 = vmatprep.subr.bf16.mxu0 0
      %1690 = vmatpush1.bf16.msra.mxu0 0
      %1691 = vmatprep.subr.bf16.mxu0 0
      %1692 = vmatpush1.bf16.msra.mxu0 0
      %1693 = vmatprep.subr.bf16.mxu0 0
      %1694 = vmatpush1.bf16.msra.mxu0 0
      %1695 = vmatprep.subr.bf16.mxu0 0
      %1696 = vmatpush1.bf16.msra.mxu0 0
      %1697 = vmatprep.subr.bf16.mxu0 0
      %1698 = vmatpush1.bf16.msra.mxu0 0
      %1699 = vmatprep.subr.bf16.mxu0 0
      %1700 = vmatpush1.bf16.msra.mxu0 0
      %1701 = vmatprep.subr.bf16.mxu0 0
      %1702 = vmatpush1.bf16.msra.mxu0 0
      %1703 = vmatprep.subr.bf16.mxu0 0
      %1704 = vmatpush1.bf16.msra.mxu0 0
      %1705 = vmatprep.subr.bf16.mxu0 0
      %1706 = vmatpush1.bf16.msra.mxu0 0
      %1707 = vmatprep.subr.bf16.mxu0 0
      %1708 = vmatpush1.bf16.msra.mxu0 0
      %1709 = vmatprep.subr.bf16.mxu0 0
      %1710 = vmatpush1.bf16.msra.mxu0 0
      %1711 = vmatprep.subr.bf16.mxu0 0
      %1712 = vmatpush1.bf16.msra.mxu0 0
      %1713 = vmatprep.subr.bf16.mxu0 0
      %1714 = vmatpush1.bf16.msra.mxu0 0
      %1715 = vmatprep.subr.bf16.mxu0 0
      %1716 = vmatpush1.bf16.msra.mxu0 0
      %1717 = vmatprep.mubr.bf16.mxu0 0
      %1718 = vmatmul.mubr.bf16.gmra.mrb[0].mxu0 %v1656
      %v1719 = vpop.f32.mrb[0].mxu0
      %v1720 = vadd.f32 %v1641, %v1719
      %v1721 = vpop.f32.mrb[0].mxu0
      %v1722 = vpop.f32.mrb[0].mxu0
      %v1723 = vadd.f32 %v1641, %v1722
      %v1724 = vpop.f32.mrb[0].mxu0
      %1725 = vmatprep.mubr.bf16.mxu0 0
      %1726 = vmatmul.mubr.bf16.gmra.mrb[0].mxu0 %v1659
      %v1727 = vpop.f32.mrb[0].mxu0
      %v1728 = vadd.f32 %v1641, %v1727
      %v1729 = vpop.f32.mrb[0].mxu0
      %v1730 = vpop.f32.mrb[0].mxu0
      %v1731 = vadd.f32 %v1641, %v1730
      %v1732 = vpop.f32.mrb[0].mxu0
      %1733 = vmatprep.mubr.bf16.mxu0 0
      %1734 = vmatmul.mubr.bf16.gmra.mrb[0].mxu0 %v1662
      %v1735 = vpop.f32.mrb[0].mxu0
      %v1736 = vadd.f32 %v1641, %v1735
      %v1737 = vpop.f32.mrb[0].mxu0
      %v1738 = vpop.f32.mrb[0].mxu0
      %v1739 = vadd.f32 %v1641, %v1738
      %v1740 = vpop.f32.mrb[0].mxu0
      %1741 = vmatprep.mubr.bf16.mxu0 0
      %1742 = vmatmul.mubr.bf16.gmra.mrb[0].mxu0 %v1665
      %v1743 = vpop.f32.mrb[0].mxu0
      %v1744 = vadd.f32 %v1641, %v1743
      %v1745 = vpop.f32.mrb[0].mxu0
      %v1746 = vpop.f32.mrb[0].mxu0
      %v1747 = vadd.f32 %v1641, %v1746
      %v1748 = vpop.f32.mrb[0].mxu0
      %1749 = vmatprep.mubr.bf16.mxu0 0
      %1750 = vmatmul.mubr.bf16.gmra.mrb[0].mxu0 %v1668
      %v1751 = vpop.f32.mrb[0].mxu0
      %v1752 = vadd.f32 %v1641, %v1751
      %v1753 = vpop.f32.mrb[0].mxu0
      %v1754 = vpop.f32.mrb[0].mxu0
      %v1755 = vadd.f32 %v1641, %v1754
      %v1756 = vpop.f32.mrb[0].mxu0
      %1757 = vmatprep.mubr.bf16.mxu0 0
      %1758 = vmatmul.mubr.bf16.gmra.mrb[0].mxu0 %v1671
      %v1759 = vpop.f32.mrb[0].mxu0
      %v1760 = vadd.f32 %v1641, %v1759
      %v1761 = vpop.f32.mrb[0].mxu0
      %v1762 = vpop.f32.mrb[0].mxu0
      %v1763 = vadd.f32 %v1641, %v1762
      %v1764 = vpop.f32.mrb[0].mxu0
      %1765 = vmatprep.mubr.bf16.mxu0 0
      %1766 = vmatmul.mubr.bf16.gmra.mrb[0].mxu0 %v1674
      %v1767 = vpop.f32.mrb[0].mxu0
      %v1768 = vadd.f32 %v1641, %v1767
      %v1769 = vpop.f32.mrb[0].mxu0
      %v1770 = vpop.f32.mrb[0].mxu0
      %v1771 = vadd.f32 %v1641, %v1770
      %v1772 = vpop.f32.mrb[0].mxu0
      %1773 = vmatprep.mubr.bf16.mxu0 0
      %1774 = vmatmul.mubr.bf16.gmra.mrb[0].mxu0 %v1677
      %v1775 = vpop.f32.mrb[0].mxu0
      %v1776 = vadd.f32 %v1641, %v1775
      %v1777 = vpop.f32.mrb[0].mxu0
      %v1778 = vpop.f32.mrb[0].mxu0
      %v1779 = vadd.f32 %v1641, %v1778
      %v1780 = vpop.f32.mrb[0].mxu0
      %1781 = vmatprep.mubr.bf16.mxu0 0
      %1782 = vmatmul.mubr.bf16.gmra.mrb[0].mxu0 %v1680
      %v1783 = vpop.f32.mrb[0].mxu0
      %v1784 = vadd.f32 %v1641, %v1783
      %v1785 = vpop.f32.mrb[0].mxu0
      %v1786 = vpop.f32.mrb[0].mxu0
      %v1787 = vadd.f32 %v1641, %v1786
      %v1788 = vpop.f32.mrb[0].mxu0
      %1789 = vmatprep.mubr.bf16.mxu0 0
      %1790 = vmatmul.mubr.bf16.gmra.mrb[0].mxu0 %v1683
      %v1791 = vpop.f32.mrb[0].mxu0
      %v1792 = vadd.f32 %v1641, %v1791
      %v1793 = vpop.f32.mrb[0].mxu0
      %v1794 = vpop.f32.mrb[0].mxu0
      %v1795 = vpop.f32.mrb[0].mxu0
      %1796 = vdwg.mxu0
      %v1797 = vmax.f32 %v1720, 0.0
      %v1798 = vmax.f32 %v1723, 0.0
      %v1799 = vmax.f32 %v1728, 0.0
      %v1800 = vmax.f32 %v1731, 0.0
      %v1801 = vmax.f32 %v1736, 0.0
      %v1802 = vmax.f32 %v1739, 0.0
      %v1803 = vmax.f32 %v1744, 0.0
      %v1804 = vmax.f32 %v1747, 0.0
      %v1805 = vmax.f32 %v1752, 0.0
      %v1806 = vmax.f32 %v1755, 0.0
      %v1807 = vmax.f32 %v1760, 0.0
      %v1808 = vmax.f32 %v1763, 0.0
      %v1809 = vmax.f32 %v1768, 0.0
      %v1810 = vmax.f32 %v1771, 0.0
      %v1811 = vmax.f32 %v1776, 0.0
      %v1812 = vmax.f32 %v1779, 0.0
      %v1813 = vmax.f32 %v1784, 0.0
      %v1814 = vmax.f32 %v1787, 0.0
      %v1815 = vmax.f32 %v1792, 0.0
      %v1816 = vld [vmem:[%s11] sm:$0xf]
      %v1817 = vld [vmem:[%s11 + $0x4] sm:$0xf]
      %v1818 = vld [vmem:[%s12] sm:$0x1]
      %v1819 = vpack.c.bf16 %v1798, %v1797
      %v1820 = vpack.c.bf16 %v1800, %v1799
      %v1821 = vpack.c.bf16 %v1802, %v1801
      %v1822 = vpack.c.bf16 %v1804, %v1803
      %v1823 = vpack.c.bf16 %v1806, %v1805
      %v1824 = vpack.c.bf16 %v1808, %v1807
      %v1825 = vpack.c.bf16 %v1810, %v1809
      %v1826 = vpack.c.bf16 %v1812, %v1811
      %v1827 = vpack.c.bf16 %v1814, %v1813
      %v1828 = vpack.c.bf16 %v1815, %v1815
      %v1830 = vlaneseq
      %v1831 = vshrl.u32 %v1830, 7
      %v1832 = vsub.s32 0, %v1831
      %v1833 = vrot.slane %v1818, %v1832
      %v1837 = vunpack.c.l.b16 %v1816
      %v1838 = vunpack.c.l.b16 %v1817
      %v1839 = vpack.c.b16 %v1838, %v1837
      %vm1841 = vcmask 130048
      %v1843 = vsel %vm1841, %v1819, 0
      %v1846 = vsel %vm1841, %v1820, 0
      %v1849 = vsel %vm1841, %v1821, 0
      %v1852 = vsel %vm1841, %v1822, 0
      %v1855 = vsel %vm1841, %v1823, 0
      %v1858 = vsel %vm1841, %v1824, 0
      %v1861 = vsel %vm1841, %v1825, 0
      %v1864 = vsel %vm1841, %v1826, 0
      %v1867 = vsel %vm1841, %v1827, 0
      %v1870 = vsel %vm1841, %v1828, 0
      %1872 = vmatprep.subr.bf16.mxu0 0
      %1873 = vmatpush1.bf16.msra.mxu0 %v1839
      %1874 = vmatprep.subr.bf16.mxu0 0
      %1875 = vmatpush1.bf16.msra.mxu0 0
      %1876 = vmatprep.subr.bf16.mxu0 0
      %1877 = vmatpush1.bf16.msra.mxu0 0
      %1878 = vmatprep.subr.bf16.mxu0 0
      %1879 = vmatpush1.bf16.msra.mxu0 0
      %1880 = vmatprep.subr.bf16.mxu0 0
      %1881 = vmatpush1.bf16.msra.mxu0 0
      %1882 = vmatprep.subr.bf16.mxu0 0
      %1883 = vmatpush1.bf16.msra.mxu0 0
      %1884 = vmatprep.subr.bf16.mxu0 0
      %1885 = vmatpush1.bf16.msra.mxu0 0
      %1886 = vmatprep.subr.bf16.mxu0 0
      %1887 = vmatpush1.bf16.msra.mxu0 0
      %1888 = vmatprep.subr.bf16.mxu0 0
      %1889 = vmatpush1.bf16.msra.mxu0 0
      %1890 = vmatprep.subr.bf16.mxu0 0
      %1891 = vmatpush1.bf16.msra.mxu0 0
      %1892 = vmatprep.subr.bf16.mxu0 0
      %1893 = vmatpush1.bf16.msra.mxu0 0
      %1894 = vmatprep.subr.bf16.mxu0 0
      %1895 = vmatpush1.bf16.msra.mxu0 0
      %1896 = vmatprep.subr.bf16.mxu0 0
      %1897 = vmatpush1.bf16.msra.mxu0 0
      %1898 = vmatprep.subr.bf16.mxu0 0
      %1899 = vmatpush1.bf16.msra.mxu0 0
      %1900 = vmatprep.subr.bf16.mxu0 0
      %1901 = vmatpush1.bf16.msra.mxu0 0
      %1902 = vmatprep.subr.bf16.mxu0 0
      %1903 = vmatpush1.bf16.msra.mxu0 0
      %1904 = vmatprep.mubr.bf16.mxu0 0
      %1905 = vmatmul.mubr.bf16.gmra.mrb[0].mxu0 %v1843
      %v1906 = vpop.f32.mrb[0].mxu0
      %v1907 = vadd.f32 %v1833, %v1906
      %v1908 = vpop.f32.mrb[0].mxu0
      %v1909 = vpop.f32.mrb[0].mxu0
      %v1910 = vadd.f32 %v1833, %v1909
      %v1911 = vpop.f32.mrb[0].mxu0
      %1912 = vmatprep.mubr.bf16.mxu0 0
      %1913 = vmatmul.mubr.bf16.gmra.mrb[0].mxu0 %v1846
      %v1914 = vpop.f32.mrb[0].mxu0
      %v1915 = vadd.f32 %v1833, %v1914
      %v1916 = vpop.f32.mrb[0].mxu0
      %v1917 = vpop.f32.mrb[0].mxu0
      %v1918 = vadd.f32 %v1833, %v1917
      %v1919 = vpop.f32.mrb[0].mxu0
      %1920 = vmatprep.mubr.bf16.mxu0 0
      %1921 = vmatmul.mubr.bf16.gmra.mrb[0].mxu0 %v1849
      %v1922 = vpop.f32.mrb[0].mxu0
      %v1923 = vadd.f32 %v1833, %v1922
      %v1924 = vpop.f32.mrb[0].mxu0
      %v1925 = vpop.f32.mrb[0].mxu0
      %v1926 = vadd.f32 %v1833, %v1925
      %v1927 = vpop.f32.mrb[0].mxu0
      %1928 = vmatprep.mubr.bf16.mxu0 0
      %1929 = vmatmul.mubr.bf16.gmra.mrb[0].mxu0 %v1852
      %v1930 = vpop.f32.mrb[0].mxu0
      %v1931 = vadd.f32 %v1833, %v1930
      %v1932 = vpop.f32.mrb[0].mxu0
      %v1933 = vpop.f32.mrb[0].mxu0
      %v1934 = vadd.f32 %v1833, %v1933
      %v1935 = vpop.f32.mrb[0].mxu0
      %1936 = vmatprep.mubr.bf16.mxu0 0
      %1937 = vmatmul.mubr.bf16.gmra.mrb[0].mxu0 %v1855
      %v1938 = vpop.f32.mrb[0].mxu0
      %v1939 = vadd.f32 %v1833, %v1938
      %v1940 = vpop.f32.mrb[0].mxu0
      %v1941 = vpop.f32.mrb[0].mxu0
      %v1942 = vadd.f32 %v1833, %v1941
      %v1943 = vpop.f32.mrb[0].mxu0
      %1944 = vmatprep.mubr.bf16.mxu0 0
      %1945 = vmatmul.mubr.bf16.gmra.mrb[0].mxu0 %v1858
      %v1946 = vpop.f32.mrb[0].mxu0
      %v1947 = vadd.f32 %v1833, %v1946
      %v1948 = vpop.f32.mrb[0].mxu0
      %v1949 = vpop.f32.mrb[0].mxu0
      %v1950 = vadd.f32 %v1833, %v1949
      %v1951 = vpop.f32.mrb[0].mxu0
      %1952 = vmatprep.mubr.bf16.mxu0 0
      %1953 = vmatmul.mubr.bf16.gmra.mrb[0].mxu0 %v1861
      %v1954 = vpop.f32.mrb[0].mxu0
      %v1955 = vadd.f32 %v1833, %v1954
      %v1956 = vpop.f32.mrb[0].mxu0
      %v1957 = vpop.f32.mrb[0].mxu0
      %v1958 = vadd.f32 %v1833, %v1957
      %v1959 = vpop.f32.mrb[0].mxu0
      %1960 = vmatprep.mubr.bf16.mxu0 0
      %1961 = vmatmul.mubr.bf16.gmra.mrb[0].mxu0 %v1864
      %v1962 = vpop.f32.mrb[0].mxu0
      %v1963 = vadd.f32 %v1833, %v1962
      %v1964 = vpop.f32.mrb[0].mxu0
      %v1965 = vpop.f32.mrb[0].mxu0
      %v1966 = vadd.f32 %v1833, %v1965
      %v1967 = vpop.f32.mrb[0].mxu0
      %1968 = vmatprep.mubr.bf16.mxu0 0
      %1969 = vmatmul.mubr.bf16.gmra.mrb[0].mxu0 %v1867
      %v1970 = vpop.f32.mrb[0].mxu0
      %v1971 = vadd.f32 %v1833, %v1970
      %v1972 = vpop.f32.mrb[0].mxu0
      %v1973 = vpop.f32.mrb[0].mxu0
      %v1974 = vadd.f32 %v1833, %v1973
      %v1975 = vpop.f32.mrb[0].mxu0
      %1976 = vmatprep.mubr.bf16.mxu0 0
      %1977 = vmatmul.mubr.bf16.gmra.mrb[0].mxu0 %v1870
      %v1978 = vpop.f32.mrb[0].mxu0
      %v1979 = vadd.f32 %v1833, %v1978
      %v1980 = vpop.f32.mrb[0].mxu0
      %v1981 = vpop.f32.mrb[0].mxu0
      %v1982 = vpop.f32.mrb[0].mxu0
      %1983 = vdwg.mxu0
      %vm1984 = vcmask 15360
      %1985 = vst.msk [vmem:[%s464] sm:$0xff] %vm1984, %v1907
      %1986 = vst.msk [vmem:[%s464 + $0x8] sm:$0xff] %vm1984, %v1910
      %1987 = vst.msk [vmem:[%s464 + $0x10] sm:$0xff] %vm1984, %v1915
      %1988 = vst.msk [vmem:[%s464 + $0x18] sm:$0xff] %vm1984, %v1918
      %1989 = vst.msk [vmem:[%s464 + $0x20] sm:$0xff] %vm1984, %v1923
      %1990 = vst.msk [vmem:[%s464 + $0x28] sm:$0xff] %vm1984, %v1926
      %1991 = vst.msk [vmem:[%s464 + $0x30] sm:$0xff] %vm1984, %v1931
      %1992 = vst.msk [vmem:[%s464 + $0x38] sm:$0xff] %vm1984, %v1934
      %1993 = vst.msk [vmem:[%s464 + $0x40] sm:$0xff] %vm1984, %v1939
      %1994 = vst.msk [vmem:[%s464 + $0x48] sm:$0xff] %vm1984, %v1942
      %1995 = vst.msk [vmem:[%s464 + $0x50] sm:$0xff] %vm1984, %v1947
      %1996 = vst.msk [vmem:[%s464 + $0x58] sm:$0xff] %vm1984, %v1950
      %1997 = vst.msk [vmem:[%s464 + $0x60] sm:$0xff] %vm1984, %v1955
      %1998 = vst.msk [vmem:[%s464 + $0x68] sm:$0xff] %vm1984, %v1958
      %1999 = vst.msk [vmem:[%s464 + $0x70] sm:$0xff] %vm1984, %v1963
      %2000 = vst.msk [vmem:[%s464 + $0x78] sm:$0xff] %vm1984, %v1966
      %2001 = vst.msk [vmem:[%s464 + $0x80] sm:$0xff] %vm1984, %v1971
      %2002 = vst.msk [vmem:[%s464 + $0x88] sm:$0xff] %vm1984, %v1974
      %2003 = vst.msk [vmem:[%s464 + $0x90] sm:$0xff] %vm1984, %v1979
      %s2004 = smul.u32 19, %s24
      %p2005 = scmp.lt.s32.totalorder %s2004, 37
      %s2006 = scalar_select %p2005, %s2004, 37
      %s2007 = smul.addr %s2006, 8
      %s2008 = scalar_lea.vmem %s13, %s2007
      // Predicated region
      $region73: #{tpu_custom_call.1} parent=71 // pred_check
        %p2009 = pneg %p325
      $region74: #{tpu_custom_call.1} parent=71 // pred_check_branch
        %2011 = sbr.rel (%p2009) target = $region76
      $region75: #{tpu_custom_call.1} parent=71 // pred_region
        %s2012 = smul.u32 19, %s24
      $region76: #{tpu_custom_call.1} parent=71 // pred_fallthru
        _
    $region72: #{tpu_custom_call.1} parent=5 // pred_fallthru
      _
    %p2013 = scmp.le.s32.totalorder 2, %s19
    // Predicated region
    $region77: #{tpu_custom_call.1} parent=5 // pred_check
      %p2014 = pneg %p2013
    $region78: #{tpu_custom_call.1} parent=5 // pred_check_branch
      %2016 = sbr.rel (%p2014) target = $region80
    $region79: #{tpu_custom_call.1} parent=5 // pred_region
      %s2017 = ssub.s32 %s19, 2
      // Predicated region
      $region81: #{tpu_custom_call.1} parent=79 // pred_check
        %p2018 = pneg %p331
      $region82: #{tpu_custom_call.1} parent=79 // pred_check_branch
        %2020 = sbr.rel (%p2018) target = $region84
      $region83: #{tpu_custom_call.1} parent=79 // pred_region
        %s2021 = smul.u32 19, %s25
        %p2022 = scmp.lt.s32.totalorder %s2021, 37
        %s2023 = scalar_select %p2022, %s2021, 37
        %s2024 = smul.addr %s2023, 8
        %s2025 = scalar_lea.vmem %s13, %s2024
      $region84: #{tpu_custom_call.1} parent=79 // pred_fallthru
        _
    $region80: #{tpu_custom_call.1} parent=5 // pred_fallthru
      _
  $region6: #{tpu_custom_call.1} parent=0 // loop_footer
    %s23 = sadd.s32 1, %s19
  $region7: #{tpu_custom_call.1} parent=0 // loop_footer_branch
    %18 = sbr.rel target = $region3
  $region8: #{tpu_custom_call.1} parent=0 // loop_exit
    _

</llo_original>
